<compile_context>
chip_gen: v6e
topology: v6e:2x2x1
jax: 0.10.0
libtpu: 0.0.40
codegen_flags: <defaults>
</compile_context>

<pallas_src>
import functools

import numpy as np

import jax
import jax.numpy as jnp
from jax.experimental import pallas as pl
from jax.experimental.pallas import tpu as pltpu


def _round_up(x, m):
    return (x + m - 1) // m * m


def _vmem_limit_bytes(needed):
    try:
        cap = pltpu.get_tpu_info().vmem_capacity_bytes   # 128 MiB v5e/v6e, 64 MiB/core v7x
    except Exception:
        cap = 64 << 20                                    # conservative fallback
    hi = int(cap * 0.85)
    return int(min(max(needed * 2, 8 << 20), hi))


def _patch_embed_kernel(x_ref, w_ref, b_ref, o_ref, lhs_ref, *,
                        C, hp, p, wp, wp8, K):
    # x_ref : (C*hp*p, wp, p)  one image's activations (input dtype)
    # w_ref : (K_pad, E_pad)   flattened conv weight (compute dtype, resident)
    # b_ref : (1, E_pad)       bias (f32, resident)
    # o_ref : (hp, wp, E_pad)  output tile for one image
    # lhs_ref: (hp*wp8, K_pad) f32 patch-matrix scratch
    K_pad = lhs_ref.shape[1]

    # Zero the lane-padding columns so no stale/NaN VMEM reaches real output
    # rows (padded weight rows are zero, but NaN * 0 == NaN).
    if K_pad > K:
        lhs_ref[:, K:] = jnp.zeros((lhs_ref.shape[0], K_pad - K), lhs_ref.dtype)

    # Fused patchify: scatter (wp, p) slabs of the NCHW activation into the
    # patch matrix.  Row offsets h*wp8 are 8-sublane aligned; the p-wide lane
    # slices become masked stores that run in store slots under the MXU/DMA.
    for c in range(C):
        for h in range(hp):
            for i in range(p):
                col = (c * p + i) * p
                lhs_ref[h * wp8:h * wp8 + wp, col:col + p] = (
                    x_ref[(c * hp + h) * p + i].astype(lhs_ref.dtype))

    # One MXU GEMM per image, f32 accumulation.
    acc = jnp.dot(lhs_ref[...].astype(w_ref.dtype), w_ref[...],
                  preferred_element_type=jnp.float32)      # (hp*wp8, E_pad)

    bias = b_ref[...]                                       # (1, E_pad) f32
    for h in range(hp):
        o_ref[h] = (acc[h * wp8:h * wp8 + wp, :] + bias).astype(o_ref.dtype)


def patch_embedding(x, weight, bias, patch_size, *,
                    compute_dtype=jnp.bfloat16, out_dtype=None):
    """x: (B, C, H, W) NCHW; weight: (E, C, p, p); bias: (E,)
    Returns (B, n_patches, E), matching PatchEmbedding.forward."""
    B, C, H, W = x.shape
    E = weight.shape[0]
    p = patch_size
    # nn.Conv2d with stride=p silently drops a remainder; we require exact tiling.
    assert H % p == 0 and W % p == 0, "img dims must be divisible by patch_size"
    assert weight.shape == (E, C, p, p)
    hp, wp = H // p, W // p
    n_patches = hp * wp
    K = C * p * p
    out_dtype = x.dtype if out_dtype is None else out_dtype

    K_pad = _round_up(K, 128)
    E_pad = _round_up(E, 128)
    wp8 = _round_up(wp, 8)
    R8 = hp * wp8

    # Free (metadata-only) reshape: (B, C, H, W) -> (B, C*hp*p, wp, p).
    # No transpose / pad / cast of the activations happens outside the kernel.
    x_view = x.reshape(B, C * hp * p, wp, p)

    # Conv weight (E, C, p, p) -> (K_pad, E_pad) compute dtype; bias -> (1, E_pad) f32.
    # TODO(synk): hoist this tiny one-time transform out of the jitted hot path
    # (pass pre-packed weights) to save a per-call launch for small-batch inference.
    w_p = jnp.zeros((K_pad, E_pad), compute_dtype).at[:K, :E].set(
        weight.reshape(E, K).T.astype(compute_dtype))
    b_p = jnp.zeros((1, E_pad), jnp.float32).at[0, :E].set(
        bias.astype(jnp.float32))

    grid = (B,)

    in_bytes = np.dtype(x.dtype).itemsize
    w_bytes = np.dtype(compute_dtype).itemsize
    out_bytes = np.dtype(out_dtype).itemsize
    block_bytes = (2 * C * H * W * in_bytes              # x tile, double-buffered
                   + 2 * hp * wp * E_pad * out_bytes     # out tile, double-buffered
                   + 2 * K_pad * E_pad * w_bytes         # resident weight (2 bufs)
                   + 2 * 2 * E_pad * 4                   # resident bias
                   + R8 * K_pad * 4)                     # lhs scratch
    vmem_limit = _vmem_limit_bytes(block_bytes)

    kernel = functools.partial(
        _patch_embed_kernel, C=C, hp=hp, p=p, wp=wp, wp8=wp8, K=K)

    out = pl.pallas_call(
        kernel,
        out_shape=jax.ShapeDtypeStruct((B, hp, wp, E_pad), out_dtype),
        grid=grid,
        in_specs=[
            pl.BlockSpec((None, C * hp * p, wp, p), lambda b: (b, 0, 0, 0)),  # streamed image
            pl.BlockSpec((K_pad, E_pad), lambda b: (0, 0)),                   # resident weight
            pl.BlockSpec((1, E_pad), lambda b: (0, 0)),                       # resident bias
        ],
        out_specs=pl.BlockSpec((None, hp, wp, E_pad), lambda b: (b, 0, 0, 0)),
        scratch_shapes=[pltpu.VMEM((R8, K_pad), jnp.float32)],
        compiler_params=pltpu.CompilerParams(
            dimension_semantics=("parallel",),
            vmem_limit_bytes=vmem_limit,
        ),
        cost_estimate=pl.CostEstimate(
            flops=2 * B * n_patches * K_pad * E_pad,
            bytes_accessed=(B * C * H * W * in_bytes
                            + K_pad * E_pad * w_bytes
                            + B * n_patches * E_pad * out_bytes),
            transcendentals=0,
        ),
    )(x_view, w_p, b_p)

    return out[..., :E].reshape(B, n_patches, E)


if __name__ == "__main__":
    # Small shapes consistent with the module's forward.
    img_size, patch_size, in_channels, embed_size = 16, 4, 4, 32
    batch = 2

    key = jax.random.PRNGKey(0)
    kx, kw, kb = jax.random.split(key, 3)

    x = jax.random.normal(kx, (batch, in_channels, img_size, img_size), jnp.float32)
    fan_in = in_channels * patch_size * patch_size
    weight = jax.random.normal(
        kw, (embed_size, in_channels, patch_size, patch_size), jnp.float32
    ) * (1.0 / fan_in) ** 0.5
    bias = jax.random.normal(kb, (embed_size,), jnp.float32) * 0.01

    fn = jax.jit(functools.partial(patch_embedding, patch_size=patch_size))
    out = jax.block_until_ready(fn(x, weight, bias))

    # Pure-JAX references (strided conv == patchify + matmul).
    hp = img_size // patch_size
    n_patches = hp * hp

    def ref_patches(xx):
        b = xx.shape[0]
        return (xx.reshape(b, in_channels, hp, patch_size, hp, patch_size)
                  .transpose(0, 2, 4, 1, 3, 5)
                  .reshape(b, n_patches, fan_in))

    pr = ref_patches(x)
    w_flat = weight.reshape(embed_size, fan_in)
    # Same bf16 operand cast / f32 accumulation as the kernel (tight check).
    ref_bf16 = jnp.einsum(
        "bnk,ek->bne",
        pr.astype(jnp.bfloat16), w_flat.astype(jnp.bfloat16),
        preferred_element_type=jnp.float32,
    ) + bias
    # Full-precision reference (loose check — bf16 operand rounding error).
    ref_f32 = jnp.einsum("bnk,ek->bne", pr, w_flat) + bias

    assert out.shape == (batch, n_patches, embed_size)
    assert out.dtype == x.dtype
    assert jnp.allclose(out, ref_bf16, atol=1e-3, rtol=1e-3)
    assert jnp.allclose(out, ref_f32, atol=5e-2, rtol=5e-2)

    # Also exercise the single-image path.
    out1 = jax.block_until_ready(fn(x[:1], weight, bias))
    ref1 = jnp.einsum("bnk,ek->bne", ref_patches(x[:1]), w_flat) + bias
    assert out1.shape == (1, n_patches, embed_size)
    assert jnp.allclose(out1, ref1, atol=5e-2, rtol=5e-2)

    print("KERNEL_OK")
</pallas_src>

<mosaic_0001>
module attributes {stable_mosaic.version = 11 : i64} {
  func.func @_patch_embed_kernel(%arg0: i32, %arg1: memref<1x64x4x4xf32, #tpu.memory_space<vmem>>, %arg2: memref<128x128xbf16, #tpu.memory_space<vmem>>, %arg3: memref<1x128xf32, #tpu.memory_space<vmem>>, %arg4: memref<1x4x4x128xf32, #tpu.memory_space<vmem>>, %arg5: memref<32x128xf32, #tpu.memory_space<vmem>>) attributes {dimension_semantics = [#tpu.dimension_semantics<parallel>], iteration_bounds = array<i64: 2>, scalar_prefetch = 0 : i64, scratch_operands = 1 : i64, tpu.core_type = #tpu.core_type<tc>, window_params = [{transform_indices = @transform_0, window_bounds = array<i64: 1, 64, 4, 4>}, {pipeline_mode = #tpu.pipeline_mode<synchronous>, transform_indices = @transform_1, window_bounds = array<i64: 128, 128>}, {pipeline_mode = #tpu.pipeline_mode<synchronous>, transform_indices = @transform_2, window_bounds = array<i64: 1, 128>}, {transform_indices = @transform_3, window_bounds = array<i64: 1, 4, 4, 128>}]} {
    %cst = arith.constant 0.000000e+00 : f32
    %0 = vector.broadcast %cst : f32 to vector<32x64xf32>
    %c0 = arith.constant 0 : index
    %c64 = arith.constant 64 : index
    %1 = vector.load %arg5[%c0, %c64] : memref<32x128xf32, #tpu.memory_space<vmem>>, vector<32x64xf32>
    tpu.vector_store %arg5[%c0, %c64], %0 {strides = array<i32>} : memref<32x128xf32, #tpu.memory_space<vmem>>, vector<32x64xf32>,
    %c0_0 = arith.constant 0 : index
    %c0_1 = arith.constant 0 : index
    %c0_2 = arith.constant 0 : index
    %c0_3 = arith.constant 0 : index
    %2 = vector.load %arg1[%c0_0, %c0_1, %c0_2, %c0_3] : memref<1x64x4x4xf32, #tpu.memory_space<vmem>>, vector<1x1x4x4xf32>
    %3 = vector.shape_cast %2 : vector<1x1x4x4xf32> to vector<4x4xf32>
    %c0_4 = arith.constant 0 : index
    %c0_5 = arith.constant 0 : index
    %4 = vector.load %arg5[%c0_4, %c0_5] : memref<32x128xf32, #tpu.memory_space<vmem>>, vector<4x4xf32>
    tpu.vector_store %arg5[%c0_4, %c0_5], %3 {strides = array<i32>} : memref<32x128xf32, #tpu.memory_space<vmem>>, vector<4x4xf32>,
    %c0_6 = arith.constant 0 : index
    %c1 = arith.constant 1 : index
    %c0_7 = arith.constant 0 : index
    %c0_8 = arith.constant 0 : index
    %5 = vector.load %arg1[%c0_6, %c1, %c0_7, %c0_8] : memref<1x64x4x4xf32, #tpu.memory_space<vmem>>, vector<1x1x4x4xf32>
    %6 = vector.shape_cast %5 : vector<1x1x4x4xf32> to vector<4x4xf32>
    %c0_9 = arith.constant 0 : index
    %c4 = arith.constant 4 : index
    %7 = vector.load %arg5[%c0_9, %c4] : memref<32x128xf32, #tpu.memory_space<vmem>>, vector<4x4xf32>
    tpu.vector_store %arg5[%c0_9, %c4], %6 {strides = array<i32>} : memref<32x128xf32, #tpu.memory_space<vmem>>, vector<4x4xf32>,
    %c0_10 = arith.constant 0 : index
    %c2 = arith.constant 2 : index
    %c0_11 = arith.constant 0 : index
    %c0_12 = arith.constant 0 : index
    %8 = vector.load %arg1[%c0_10, %c2, %c0_11, %c0_12] : memref<1x64x4x4xf32, #tpu.memory_space<vmem>>, vector<1x1x4x4xf32>
    %9 = vector.shape_cast %8 : vector<1x1x4x4xf32> to vector<4x4xf32>
    %c0_13 = arith.constant 0 : index
    %c8 = arith.constant 8 : index
    %10 = vector.load %arg5[%c0_13, %c8] : memref<32x128xf32, #tpu.memory_space<vmem>>, vector<4x4xf32>
    tpu.vector_store %arg5[%c0_13, %c8], %9 {strides = array<i32>} : memref<32x128xf32, #tpu.memory_space<vmem>>, vector<4x4xf32>,
    %c0_14 = arith.constant 0 : index
    %c3 = arith.constant 3 : index
    %c0_15 = arith.constant 0 : index
    %c0_16 = arith.constant 0 : index
    %11 = vector.load %arg1[%c0_14, %c3, %c0_15, %c0_16] : memref<1x64x4x4xf32, #tpu.memory_space<vmem>>, vector<1x1x4x4xf32>
    %12 = vector.shape_cast %11 : vector<1x1x4x4xf32> to vector<4x4xf32>
    %c0_17 = arith.constant 0 : index
    %c12 = arith.constant 12 : index
    %13 = vector.load %arg5[%c0_17, %c12] : memref<32x128xf32, #tpu.memory_space<vmem>>, vector<4x4xf32>
    tpu.vector_store %arg5[%c0_17, %c12], %12 {strides = array<i32>} : memref<32x128xf32, #tpu.memory_space<vmem>>, vector<4x4xf32>,
    %c0_18 = arith.constant 0 : index
    %c4_19 = arith.constant 4 : index
    %c0_20 = arith.constant 0 : index
    %c0_21 = arith.constant 0 : index
    %14 = vector.load %arg1[%c0_18, %c4_19, %c0_20, %c0_21] : memref<1x64x4x4xf32, #tpu.memory_space<vmem>>, vector<1x1x4x4xf32>
    %15 = vector.shape_cast %14 : vector<1x1x4x4xf32> to vector<4x4xf32>
    %c8_22 = arith.constant 8 : index
    %c0_23 = arith.constant 0 : index
    %16 = vector.load %arg5[%c8_22, %c0_23] : memref<32x128xf32, #tpu.memory_space<vmem>>, vector<4x4xf32>
    tpu.vector_store %arg5[%c8_22, %c0_23], %15 {strides = array<i32>} : memref<32x128xf32, #tpu.memory_space<vmem>>, vector<4x4xf32>,
    %c0_24 = arith.constant 0 : index
    %c5 = arith.constant 5 : index
    %c0_25 = arith.constant 0 : index
    %c0_26 = arith.constant 0 : index
    %17 = vector.load %arg1[%c0_24, %c5, %c0_25, %c0_26] : memref<1x64x4x4xf32, #tpu.memory_space<vmem>>, vector<1x1x4x4xf32>
    %18 = vector.shape_cast %17 : vector<1x1x4x4xf32> to vector<4x4xf32>
    %c8_27 = arith.constant 8 : index
    %c4_28 = arith.constant 4 : index
    %19 = vector.load %arg5[%c8_27, %c4_28] : memref<32x128xf32, #tpu.memory_space<vmem>>, vector<4x4xf32>
    tpu.vector_store %arg5[%c8_27, %c4_28], %18 {strides = array<i32>} : memref<32x128xf32, #tpu.memory_space<vmem>>, vector<4x4xf32>,
    %c0_29 = arith.constant 0 : index
    %c6 = arith.constant 6 : index
    %c0_30 = arith.constant 0 : index
    %c0_31 = arith.constant 0 : index
    %20 = vector.load %arg1[%c0_29, %c6, %c0_30, %c0_31] : memref<1x64x4x4xf32, #tpu.memory_space<vmem>>, vector<1x1x4x4xf32>
    %21 = vector.shape_cast %20 : vector<1x1x4x4xf32> to vector<4x4xf32>
    %c8_32 = arith.constant 8 : index
    %c8_33 = arith.constant 8 : index
    %22 = vector.load %arg5[%c8_32, %c8_33] : memref<32x128xf32, #tpu.memory_space<vmem>>, vector<4x4xf32>
    tpu.vector_store %arg5[%c8_32, %c8_33], %21 {strides = array<i32>} : memref<32x128xf32, #tpu.memory_space<vmem>>, vector<4x4xf32>,
    %c0_34 = arith.constant 0 : index
    %c7 = arith.constant 7 : index
    %c0_35 = arith.constant 0 : index
    %c0_36 = arith.constant 0 : index
    %23 = vector.load %arg1[%c0_34, %c7, %c0_35, %c0_36] : memref<1x64x4x4xf32, #tpu.memory_space<vmem>>, vector<1x1x4x4xf32>
    %24 = vector.shape_cast %23 : vector<1x1x4x4xf32> to vector<4x4xf32>
    %c8_37 = arith.constant 8 : index
    %c12_38 = arith.constant 12 : index
    %25 = vector.load %arg5[%c8_37, %c12_38] : memref<32x128xf32, #tpu.memory_space<vmem>>, vector<4x4xf32>
    tpu.vector_store %arg5[%c8_37, %c12_38], %24 {strides = array<i32>} : memref<32x128xf32, #tpu.memory_space<vmem>>, vector<4x4xf32>,
    %c0_39 = arith.constant 0 : index
    %c8_40 = arith.constant 8 : index
    %c0_41 = arith.constant 0 : index
    %c0_42 = arith.constant 0 : index
    %26 = vector.load %arg1[%c0_39, %c8_40, %c0_41, %c0_42] : memref<1x64x4x4xf32, #tpu.memory_space<vmem>>, vector<1x1x4x4xf32>
    %27 = vector.shape_cast %26 : vector<1x1x4x4xf32> to vector<4x4xf32>
    %c16 = arith.constant 16 : index
    %c0_43 = arith.constant 0 : index
    %28 = vector.load %arg5[%c16, %c0_43] : memref<32x128xf32, #tpu.memory_space<vmem>>, vector<4x4xf32>
    tpu.vector_store %arg5[%c16, %c0_43], %27 {strides = array<i32>} : memref<32x128xf32, #tpu.memory_space<vmem>>, vector<4x4xf32>,
    %c0_44 = arith.constant 0 : index
    %c9 = arith.constant 9 : index
    %c0_45 = arith.constant 0 : index
    %c0_46 = arith.constant 0 : index
    %29 = vector.load %arg1[%c0_44, %c9, %c0_45, %c0_46] : memref<1x64x4x4xf32, #tpu.memory_space<vmem>>, vector<1x1x4x4xf32>
    %30 = vector.shape_cast %29 : vector<1x1x4x4xf32> to vector<4x4xf32>
    %c16_47 = arith.constant 16 : index
    %c4_48 = arith.constant 4 : index
    %31 = vector.load %arg5[%c16_47, %c4_48] : memref<32x128xf32, #tpu.memory_space<vmem>>, vector<4x4xf32>
    tpu.vector_store %arg5[%c16_47, %c4_48], %30 {strides = array<i32>} : memref<32x128xf32, #tpu.memory_space<vmem>>, vector<4x4xf32>,
    %c0_49 = arith.constant 0 : index
    %c10 = arith.constant 10 : index
    %c0_50 = arith.constant 0 : index
    %c0_51 = arith.constant 0 : index
    %32 = vector.load %arg1[%c0_49, %c10, %c0_50, %c0_51] : memref<1x64x4x4xf32, #tpu.memory_space<vmem>>, vector<1x1x4x4xf32>
    %33 = vector.shape_cast %32 : vector<1x1x4x4xf32> to vector<4x4xf32>
    %c16_52 = arith.constant 16 : index
    %c8_53 = arith.constant 8 : index
    %34 = vector.load %arg5[%c16_52, %c8_53] : memref<32x128xf32, #tpu.memory_space<vmem>>, vector<4x4xf32>
    tpu.vector_store %arg5[%c16_52, %c8_53], %33 {strides = array<i32>} : memref<32x128xf32, #tpu.memory_space<vmem>>, vector<4x4xf32>,
    %c0_54 = arith.constant 0 : index
    %c11 = arith.constant 11 : index
    %c0_55 = arith.constant 0 : index
    %c0_56 = arith.constant 0 : index
    %35 = vector.load %arg1[%c0_54, %c11, %c0_55, %c0_56] : memref<1x64x4x4xf32, #tpu.memory_space<vmem>>, vector<1x1x4x4xf32>
    %36 = vector.shape_cast %35 : vector<1x1x4x4xf32> to vector<4x4xf32>
    %c16_57 = arith.constant 16 : index
    %c12_58 = arith.constant 12 : index
    %37 = vector.load %arg5[%c16_57, %c12_58] : memref<32x128xf32, #tpu.memory_space<vmem>>, vector<4x4xf32>
    tpu.vector_store %arg5[%c16_57, %c12_58], %36 {strides = array<i32>} : memref<32x128xf32, #tpu.memory_space<vmem>>, vector<4x4xf32>,
    %c0_59 = arith.constant 0 : index
    %c12_60 = arith.constant 12 : index
    %c0_61 = arith.constant 0 : index
    %c0_62 = arith.constant 0 : index
    %38 = vector.load %arg1[%c0_59, %c12_60, %c0_61, %c0_62] : memref<1x64x4x4xf32, #tpu.memory_space<vmem>>, vector<1x1x4x4xf32>
    %39 = vector.shape_cast %38 : vector<1x1x4x4xf32> to vector<4x4xf32>
    %c24 = arith.constant 24 : index
    %c0_63 = arith.constant 0 : index
    %40 = vector.load %arg5[%c24, %c0_63] : memref<32x128xf32, #tpu.memory_space<vmem>>, vector<4x4xf32>
    tpu.vector_store %arg5[%c24, %c0_63], %39 {strides = array<i32>} : memref<32x128xf32, #tpu.memory_space<vmem>>, vector<4x4xf32>,
    %c0_64 = arith.constant 0 : index
    %c13 = arith.constant 13 : index
    %c0_65 = arith.constant 0 : index
    %c0_66 = arith.constant 0 : index
    %41 = vector.load %arg1[%c0_64, %c13, %c0_65, %c0_66] : memref<1x64x4x4xf32, #tpu.memory_space<vmem>>, vector<1x1x4x4xf32>
    %42 = vector.shape_cast %41 : vector<1x1x4x4xf32> to vector<4x4xf32>
    %c24_67 = arith.constant 24 : index
    %c4_68 = arith.constant 4 : index
    %43 = vector.load %arg5[%c24_67, %c4_68] : memref<32x128xf32, #tpu.memory_space<vmem>>, vector<4x4xf32>
    tpu.vector_store %arg5[%c24_67, %c4_68], %42 {strides = array<i32>} : memref<32x128xf32, #tpu.memory_space<vmem>>, vector<4x4xf32>,
    %c0_69 = arith.constant 0 : index
    %c14 = arith.constant 14 : index
    %c0_70 = arith.constant 0 : index
    %c0_71 = arith.constant 0 : index
    %44 = vector.load %arg1[%c0_69, %c14, %c0_70, %c0_71] : memref<1x64x4x4xf32, #tpu.memory_space<vmem>>, vector<1x1x4x4xf32>
    %45 = vector.shape_cast %44 : vector<1x1x4x4xf32> to vector<4x4xf32>
    %c24_72 = arith.constant 24 : index
    %c8_73 = arith.constant 8 : index
    %46 = vector.load %arg5[%c24_72, %c8_73] : memref<32x128xf32, #tpu.memory_space<vmem>>, vector<4x4xf32>
    tpu.vector_store %arg5[%c24_72, %c8_73], %45 {strides = array<i32>} : memref<32x128xf32, #tpu.memory_space<vmem>>, vector<4x4xf32>,
    %c0_74 = arith.constant 0 : index
    %c15 = arith.constant 15 : index
    %c0_75 = arith.constant 0 : index
    %c0_76 = arith.constant 0 : index
    %47 = vector.load %arg1[%c0_74, %c15, %c0_75, %c0_76] : memref<1x64x4x4xf32, #tpu.memory_space<vmem>>, vector<1x1x4x4xf32>
    %48 = vector.shape_cast %47 : vector<1x1x4x4xf32> to vector<4x4xf32>
    %c24_77 = arith.constant 24 : index
    %c12_78 = arith.constant 12 : index
    %49 = vector.load %arg5[%c24_77, %c12_78] : memref<32x128xf32, #tpu.memory_space<vmem>>, vector<4x4xf32>
    tpu.vector_store %arg5[%c24_77, %c12_78], %48 {strides = array<i32>} : memref<32x128xf32, #tpu.memory_space<vmem>>, vector<4x4xf32>,
    %c0_79 = arith.constant 0 : index
    %c16_80 = arith.constant 16 : index
    %c0_81 = arith.constant 0 : index
    %c0_82 = arith.constant 0 : index
    %50 = vector.load %arg1[%c0_79, %c16_80, %c0_81, %c0_82] : memref<1x64x4x4xf32, #tpu.memory_space<vmem>>, vector<1x1x4x4xf32>
    %51 = vector.shape_cast %50 : vector<1x1x4x4xf32> to vector<4x4xf32>
    %c0_83 = arith.constant 0 : index
    %c16_84 = arith.constant 16 : index
    %52 = vector.load %arg5[%c0_83, %c16_84] : memref<32x128xf32, #tpu.memory_space<vmem>>, vector<4x4xf32>
    tpu.vector_store %arg5[%c0_83, %c16_84], %51 {strides = array<i32>} : memref<32x128xf32, #tpu.memory_space<vmem>>, vector<4x4xf32>,
    %c0_85 = arith.constant 0 : index
    %c17 = arith.constant 17 : index
    %c0_86 = arith.constant 0 : index
    %c0_87 = arith.constant 0 : index
    %53 = vector.load %arg1[%c0_85, %c17, %c0_86, %c0_87] : memref<1x64x4x4xf32, #tpu.memory_space<vmem>>, vector<1x1x4x4xf32>
    %54 = vector.shape_cast %53 : vector<1x1x4x4xf32> to vector<4x4xf32>
    %c0_88 = arith.constant 0 : index
    %c20 = arith.constant 20 : index
    %55 = vector.load %arg5[%c0_88, %c20] : memref<32x128xf32, #tpu.memory_space<vmem>>, vector<4x4xf32>
    tpu.vector_store %arg5[%c0_88, %c20], %54 {strides = array<i32>} : memref<32x128xf32, #tpu.memory_space<vmem>>, vector<4x4xf32>,
    %c0_89 = arith.constant 0 : index
    %c18 = arith.constant 18 : index
    %c0_90 = arith.constant 0 : index
    %c0_91 = arith.constant 0 : index
    %56 = vector.load %arg1[%c0_89, %c18, %c0_90, %c0_91] : memref<1x64x4x4xf32, #tpu.memory_space<vmem>>, vector<1x1x4x4xf32>
    %57 = vector.shape_cast %56 : vector<1x1x4x4xf32> to vector<4x4xf32>
    %c0_92 = arith.constant 0 : index
    %c24_93 = arith.constant 24 : index
    %58 = vector.load %arg5[%c0_92, %c24_93] : memref<32x128xf32, #tpu.memory_space<vmem>>, vector<4x4xf32>
    tpu.vector_store %arg5[%c0_92, %c24_93], %57 {strides = array<i32>} : memref<32x128xf32, #tpu.memory_space<vmem>>, vector<4x4xf32>,
    %c0_94 = arith.constant 0 : index
    %c19 = arith.constant 19 : index
    %c0_95 = arith.constant 0 : index
    %c0_96 = arith.constant 0 : index
    %59 = vector.load %arg1[%c0_94, %c19, %c0_95, %c0_96] : memref<1x64x4x4xf32, #tpu.memory_space<vmem>>, vector<1x1x4x4xf32>
    %60 = vector.shape_cast %59 : vector<1x1x4x4xf32> to vector<4x4xf32>
    %c0_97 = arith.constant 0 : index
    %c28 = arith.constant 28 : index
    %61 = vector.load %arg5[%c0_97, %c28] : memref<32x128xf32, #tpu.memory_space<vmem>>, vector<4x4xf32>
    tpu.vector_store %arg5[%c0_97, %c28], %60 {strides = array<i32>} : memref<32x128xf32, #tpu.memory_space<vmem>>, vector<4x4xf32>,
    %c0_98 = arith.constant 0 : index
    %c20_99 = arith.constant 20 : index
    %c0_100 = arith.constant 0 : index
    %c0_101 = arith.constant 0 : index
    %62 = vector.load %arg1[%c0_98, %c20_99, %c0_100, %c0_101] : memref<1x64x4x4xf32, #tpu.memory_space<vmem>>, vector<1x1x4x4xf32>
    %63 = vector.shape_cast %62 : vector<1x1x4x4xf32> to vector<4x4xf32>
    %c8_102 = arith.constant 8 : index
    %c16_103 = arith.constant 16 : index
    %64 = vector.load %arg5[%c8_102, %c16_103] : memref<32x128xf32, #tpu.memory_space<vmem>>, vector<4x4xf32>
    tpu.vector_store %arg5[%c8_102, %c16_103], %63 {strides = array<i32>} : memref<32x128xf32, #tpu.memory_space<vmem>>, vector<4x4xf32>,
    %c0_104 = arith.constant 0 : index
    %c21 = arith.constant 21 : index
    %c0_105 = arith.constant 0 : index
    %c0_106 = arith.constant 0 : index
    %65 = vector.load %arg1[%c0_104, %c21, %c0_105, %c0_106] : memref<1x64x4x4xf32, #tpu.memory_space<vmem>>, vector<1x1x4x4xf32>
    %66 = vector.shape_cast %65 : vector<1x1x4x4xf32> to vector<4x4xf32>
    %c8_107 = arith.constant 8 : index
    %c20_108 = arith.constant 20 : index
    %67 = vector.load %arg5[%c8_107, %c20_108] : memref<32x128xf32, #tpu.memory_space<vmem>>, vector<4x4xf32>
    tpu.vector_store %arg5[%c8_107, %c20_108], %66 {strides = array<i32>} : memref<32x128xf32, #tpu.memory_space<vmem>>, vector<4x4xf32>,
    %c0_109 = arith.constant 0 : index
    %c22 = arith.constant 22 : index
    %c0_110 = arith.constant 0 : index
    %c0_111 = arith.constant 0 : index
    %68 = vector.load %arg1[%c0_109, %c22, %c0_110, %c0_111] : memref<1x64x4x4xf32, #tpu.memory_space<vmem>>, vector<1x1x4x4xf32>
    %69 = vector.shape_cast %68 : vector<1x1x4x4xf32> to vector<4x4xf32>
    %c8_112 = arith.constant 8 : index
    %c24_113 = arith.constant 24 : index
    %70 = vector.load %arg5[%c8_112, %c24_113] : memref<32x128xf32, #tpu.memory_space<vmem>>, vector<4x4xf32>
    tpu.vector_store %arg5[%c8_112, %c24_113], %69 {strides = array<i32>} : memref<32x128xf32, #tpu.memory_space<vmem>>, vector<4x4xf32>,
    %c0_114 = arith.constant 0 : index
    %c23 = arith.constant 23 : index
    %c0_115 = arith.constant 0 : index
    %c0_116 = arith.constant 0 : index
    %71 = vector.load %arg1[%c0_114, %c23, %c0_115, %c0_116] : memref<1x64x4x4xf32, #tpu.memory_space<vmem>>, vector<1x1x4x4xf32>
    %72 = vector.shape_cast %71 : vector<1x1x4x4xf32> to vector<4x4xf32>
    %c8_117 = arith.constant 8 : index
    %c28_118 = arith.constant 28 : index
    %73 = vector.load %arg5[%c8_117, %c28_118] : memref<32x128xf32, #tpu.memory_space<vmem>>, vector<4x4xf32>
    tpu.vector_store %arg5[%c8_117, %c28_118], %72 {strides = array<i32>} : memref<32x128xf32, #tpu.memory_space<vmem>>, vector<4x4xf32>,
    %c0_119 = arith.constant 0 : index
    %c24_120 = arith.constant 24 : index
    %c0_121 = arith.constant 0 : index
    %c0_122 = arith.constant 0 : index
    %74 = vector.load %arg1[%c0_119, %c24_120, %c0_121, %c0_122] : memref<1x64x4x4xf32, #tpu.memory_space<vmem>>, vector<1x1x4x4xf32>
    %75 = vector.shape_cast %74 : vector<1x1x4x4xf32> to vector<4x4xf32>
    %c16_123 = arith.constant 16 : index
    %c16_124 = arith.constant 16 : index
    %76 = vector.load %arg5[%c16_123, %c16_124] : memref<32x128xf32, #tpu.memory_space<vmem>>, vector<4x4xf32>
    tpu.vector_store %arg5[%c16_123, %c16_124], %75 {strides = array<i32>} : memref<32x128xf32, #tpu.memory_space<vmem>>, vector<4x4xf32>,
    %c0_125 = arith.constant 0 : index
    %c25 = arith.constant 25 : index
    %c0_126 = arith.constant 0 : index
    %c0_127 = arith.constant 0 : index
    %77 = vector.load %arg1[%c0_125, %c25, %c0_126, %c0_127] : memref<1x64x4x4xf32, #tpu.memory_space<vmem>>, vector<1x1x4x4xf32>
    %78 = vector.shape_cast %77 : vector<1x1x4x4xf32> to vector<4x4xf32>
    %c16_128 = arith.constant 16 : index
    %c20_129 = arith.constant 20 : index
    %79 = vector.load %arg5[%c16_128, %c20_129] : memref<32x128xf32, #tpu.memory_space<vmem>>, vector<4x4xf32>
    tpu.vector_store %arg5[%c16_128, %c20_129], %78 {strides = array<i32>} : memref<32x128xf32, #tpu.memory_space<vmem>>, vector<4x4xf32>,
    %c0_130 = arith.constant 0 : index
    %c26 = arith.constant 26 : index
    %c0_131 = arith.constant 0 : index
    %c0_132 = arith.constant 0 : index
    %80 = vector.load %arg1[%c0_130, %c26, %c0_131, %c0_132] : memref<1x64x4x4xf32, #tpu.memory_space<vmem>>, vector<1x1x4x4xf32>
    %81 = vector.shape_cast %80 : vector<1x1x4x4xf32> to vector<4x4xf32>
    %c16_133 = arith.constant 16 : index
    %c24_134 = arith.constant 24 : index
    %82 = vector.load %arg5[%c16_133, %c24_134] : memref<32x128xf32, #tpu.memory_space<vmem>>, vector<4x4xf32>
    tpu.vector_store %arg5[%c16_133, %c24_134], %81 {strides = array<i32>} : memref<32x128xf32, #tpu.memory_space<vmem>>, vector<4x4xf32>,
    %c0_135 = arith.constant 0 : index
    %c27 = arith.constant 27 : index
    %c0_136 = arith.constant 0 : index
    %c0_137 = arith.constant 0 : index
    %83 = vector.load %arg1[%c0_135, %c27, %c0_136, %c0_137] : memref<1x64x4x4xf32, #tpu.memory_space<vmem>>, vector<1x1x4x4xf32>
    %84 = vector.shape_cast %83 : vector<1x1x4x4xf32> to vector<4x4xf32>
    %c16_138 = arith.constant 16 : index
    %c28_139 = arith.constant 28 : index
    %85 = vector.load %arg5[%c16_138, %c28_139] : memref<32x128xf32, #tpu.memory_space<vmem>>, vector<4x4xf32>
    tpu.vector_store %arg5[%c16_138, %c28_139], %84 {strides = array<i32>} : memref<32x128xf32, #tpu.memory_space<vmem>>, vector<4x4xf32>,
    %c0_140 = arith.constant 0 : index
    %c28_141 = arith.constant 28 : index
    %c0_142 = arith.constant 0 : index
    %c0_143 = arith.constant 0 : index
    %86 = vector.load %arg1[%c0_140, %c28_141, %c0_142, %c0_143] : memref<1x64x4x4xf32, #tpu.memory_space<vmem>>, vector<1x1x4x4xf32>
    %87 = vector.shape_cast %86 : vector<1x1x4x4xf32> to vector<4x4xf32>
    %c24_144 = arith.constant 24 : index
    %c16_145 = arith.constant 16 : index
    %88 = vector.load %arg5[%c24_144, %c16_145] : memref<32x128xf32, #tpu.memory_space<vmem>>, vector<4x4xf32>
    tpu.vector_store %arg5[%c24_144, %c16_145], %87 {strides = array<i32>} : memref<32x128xf32, #tpu.memory_space<vmem>>, vector<4x4xf32>,
    %c0_146 = arith.constant 0 : index
    %c29 = arith.constant 29 : index
    %c0_147 = arith.constant 0 : index
    %c0_148 = arith.constant 0 : index
    %89 = vector.load %arg1[%c0_146, %c29, %c0_147, %c0_148] : memref<1x64x4x4xf32, #tpu.memory_space<vmem>>, vector<1x1x4x4xf32>
    %90 = vector.shape_cast %89 : vector<1x1x4x4xf32> to vector<4x4xf32>
    %c24_149 = arith.constant 24 : index
    %c20_150 = arith.constant 20 : index
    %91 = vector.load %arg5[%c24_149, %c20_150] : memref<32x128xf32, #tpu.memory_space<vmem>>, vector<4x4xf32>
    tpu.vector_store %arg5[%c24_149, %c20_150], %90 {strides = array<i32>} : memref<32x128xf32, #tpu.memory_space<vmem>>, vector<4x4xf32>,
    %c0_151 = arith.constant 0 : index
    %c30 = arith.constant 30 : index
    %c0_152 = arith.constant 0 : index
    %c0_153 = arith.constant 0 : index
    %92 = vector.load %arg1[%c0_151, %c30, %c0_152, %c0_153] : memref<1x64x4x4xf32, #tpu.memory_space<vmem>>, vector<1x1x4x4xf32>
    %93 = vector.shape_cast %92 : vector<1x1x4x4xf32> to vector<4x4xf32>
    %c24_154 = arith.constant 24 : index
    %c24_155 = arith.constant 24 : index
    %94 = vector.load %arg5[%c24_154, %c24_155] : memref<32x128xf32, #tpu.memory_space<vmem>>, vector<4x4xf32>
    tpu.vector_store %arg5[%c24_154, %c24_155], %93 {strides = array<i32>} : memref<32x128xf32, #tpu.memory_space<vmem>>, vector<4x4xf32>,
    %c0_156 = arith.constant 0 : index
    %c31 = arith.constant 31 : index
    %c0_157 = arith.constant 0 : index
    %c0_158 = arith.constant 0 : index
    %95 = vector.load %arg1[%c0_156, %c31, %c0_157, %c0_158] : memref<1x64x4x4xf32, #tpu.memory_space<vmem>>, vector<1x1x4x4xf32>
    %96 = vector.shape_cast %95 : vector<1x1x4x4xf32> to vector<4x4xf32>
    %c24_159 = arith.constant 24 : index
    %c28_160 = arith.constant 28 : index
    %97 = vector.load %arg5[%c24_159, %c28_160] : memref<32x128xf32, #tpu.memory_space<vmem>>, vector<4x4xf32>
    tpu.vector_store %arg5[%c24_159, %c28_160], %96 {strides = array<i32>} : memref<32x128xf32, #tpu.memory_space<vmem>>, vector<4x4xf32>,
    %c0_161 = arith.constant 0 : index
    %c32 = arith.constant 32 : index
    %c0_162 = arith.constant 0 : index
    %c0_163 = arith.constant 0 : index
    %98 = vector.load %arg1[%c0_161, %c32, %c0_162, %c0_163] : memref<1x64x4x4xf32, #tpu.memory_space<vmem>>, vector<1x1x4x4xf32>
    %99 = vector.shape_cast %98 : vector<1x1x4x4xf32> to vector<4x4xf32>
    %c0_164 = arith.constant 0 : index
    %c32_165 = arith.constant 32 : index
    %100 = vector.load %arg5[%c0_164, %c32_165] : memref<32x128xf32, #tpu.memory_space<vmem>>, vector<4x4xf32>
    tpu.vector_store %arg5[%c0_164, %c32_165], %99 {strides = array<i32>} : memref<32x128xf32, #tpu.memory_space<vmem>>, vector<4x4xf32>,
    %c0_166 = arith.constant 0 : index
    %c33 = arith.constant 33 : index
    %c0_167 = arith.constant 0 : index
    %c0_168 = arith.constant 0 : index
    %101 = vector.load %arg1[%c0_166, %c33, %c0_167, %c0_168] : memref<1x64x4x4xf32, #tpu.memory_space<vmem>>, vector<1x1x4x4xf32>
    %102 = vector.shape_cast %101 : vector<1x1x4x4xf32> to vector<4x4xf32>
    %c0_169 = arith.constant 0 : index
    %c36 = arith.constant 36 : index
    %103 = vector.load %arg5[%c0_169, %c36] : memref<32x128xf32, #tpu.memory_space<vmem>>, vector<4x4xf32>
    tpu.vector_store %arg5[%c0_169, %c36], %102 {strides = array<i32>} : memref<32x128xf32, #tpu.memory_space<vmem>>, vector<4x4xf32>,
    %c0_170 = arith.constant 0 : index
    %c34 = arith.constant 34 : index
    %c0_171 = arith.constant 0 : index
    %c0_172 = arith.constant 0 : index
    %104 = vector.load %arg1[%c0_170, %c34, %c0_171, %c0_172] : memref<1x64x4x4xf32, #tpu.memory_space<vmem>>, vector<1x1x4x4xf32>
    %105 = vector.shape_cast %104 : vector<1x1x4x4xf32> to vector<4x4xf32>
    %c0_173 = arith.constant 0 : index
    %c40 = arith.constant 40 : index
    %106 = vector.load %arg5[%c0_173, %c40] : memref<32x128xf32, #tpu.memory_space<vmem>>, vector<4x4xf32>
    tpu.vector_store %arg5[%c0_173, %c40], %105 {strides = array<i32>} : memref<32x128xf32, #tpu.memory_space<vmem>>, vector<4x4xf32>,
    %c0_174 = arith.constant 0 : index
    %c35 = arith.constant 35 : index
    %c0_175 = arith.constant 0 : index
    %c0_176 = arith.constant 0 : index
    %107 = vector.load %arg1[%c0_174, %c35, %c0_175, %c0_176] : memref<1x64x4x4xf32, #tpu.memory_space<vmem>>, vector<1x1x4x4xf32>
    %108 = vector.shape_cast %107 : vector<1x1x4x4xf32> to vector<4x4xf32>
    %c0_177 = arith.constant 0 : index
    %c44 = arith.constant 44 : index
    %109 = vector.load %arg5[%c0_177, %c44] : memref<32x128xf32, #tpu.memory_space<vmem>>, vector<4x4xf32>
    tpu.vector_store %arg5[%c0_177, %c44], %108 {strides = array<i32>} : memref<32x128xf32, #tpu.memory_space<vmem>>, vector<4x4xf32>,
    %c0_178 = arith.constant 0 : index
    %c36_179 = arith.constant 36 : index
    %c0_180 = arith.constant 0 : index
    %c0_181 = arith.constant 0 : index
    %110 = vector.load %arg1[%c0_178, %c36_179, %c0_180, %c0_181] : memref<1x64x4x4xf32, #tpu.memory_space<vmem>>, vector<1x1x4x4xf32>
    %111 = vector.shape_cast %110 : vector<1x1x4x4xf32> to vector<4x4xf32>
    %c8_182 = arith.constant 8 : index
    %c32_183 = arith.constant 32 : index
    %112 = vector.load %arg5[%c8_182, %c32_183] : memref<32x128xf32, #tpu.memory_space<vmem>>, vector<4x4xf32>
    tpu.vector_store %arg5[%c8_182, %c32_183], %111 {strides = array<i32>} : memref<32x128xf32, #tpu.memory_space<vmem>>, vector<4x4xf32>,
    %c0_184 = arith.constant 0 : index
    %c37 = arith.constant 37 : index
    %c0_185 = arith.constant 0 : index
    %c0_186 = arith.constant 0 : index
    %113 = vector.load %arg1[%c0_184, %c37, %c0_185, %c0_186] : memref<1x64x4x4xf32, #tpu.memory_space<vmem>>, vector<1x1x4x4xf32>
    %114 = vector.shape_cast %113 : vector<1x1x4x4xf32> to vector<4x4xf32>
    %c8_187 = arith.constant 8 : index
    %c36_188 = arith.constant 36 : index
    %115 = vector.load %arg5[%c8_187, %c36_188] : memref<32x128xf32, #tpu.memory_space<vmem>>, vector<4x4xf32>
    tpu.vector_store %arg5[%c8_187, %c36_188], %114 {strides = array<i32>} : memref<32x128xf32, #tpu.memory_space<vmem>>, vector<4x4xf32>,
    %c0_189 = arith.constant 0 : index
    %c38 = arith.constant 38 : index
    %c0_190 = arith.constant 0 : index
    %c0_191 = arith.constant 0 : index
    %116 = vector.load %arg1[%c0_189, %c38, %c0_190, %c0_191] : memref<1x64x4x4xf32, #tpu.memory_space<vmem>>, vector<1x1x4x4xf32>
    %117 = vector.shape_cast %116 : vector<1x1x4x4xf32> to vector<4x4xf32>
    %c8_192 = arith.constant 8 : index
    %c40_193 = arith.constant 40 : index
    %118 = vector.load %arg5[%c8_192, %c40_193] : memref<32x128xf32, #tpu.memory_space<vmem>>, vector<4x4xf32>
    tpu.vector_store %arg5[%c8_192, %c40_193], %117 {strides = array<i32>} : memref<32x128xf32, #tpu.memory_space<vmem>>, vector<4x4xf32>,
    %c0_194 = arith.constant 0 : index
    %c39 = arith.constant 39 : index
    %c0_195 = arith.constant 0 : index
    %c0_196 = arith.constant 0 : index
    %119 = vector.load %arg1[%c0_194, %c39, %c0_195, %c0_196] : memref<1x64x4x4xf32, #tpu.memory_space<vmem>>, vector<1x1x4x4xf32>
    %120 = vector.shape_cast %119 : vector<1x1x4x4xf32> to vector<4x4xf32>
    %c8_197 = arith.constant 8 : index
    %c44_198 = arith.constant 44 : index
    %121 = vector.load %arg5[%c8_197, %c44_198] : memref<32x128xf32, #tpu.memory_space<vmem>>, vector<4x4xf32>
    tpu.vector_store %arg5[%c8_197, %c44_198], %120 {strides = array<i32>} : memref<32x128xf32, #tpu.memory_space<vmem>>, vector<4x4xf32>,
    %c0_199 = arith.constant 0 : index
    %c40_200 = arith.constant 40 : index
    %c0_201 = arith.constant 0 : index
    %c0_202 = arith.constant 0 : index
    %122 = vector.load %arg1[%c0_199, %c40_200, %c0_201, %c0_202] : memref<1x64x4x4xf32, #tpu.memory_space<vmem>>, vector<1x1x4x4xf32>
    %123 = vector.shape_cast %122 : vector<1x1x4x4xf32> to vector<4x4xf32>
    %c16_203 = arith.constant 16 : index
    %c32_204 = arith.constant 32 : index
    %124 = vector.load %arg5[%c16_203, %c32_204] : memref<32x128xf32, #tpu.memory_space<vmem>>, vector<4x4xf32>
    tpu.vector_store %arg5[%c16_203, %c32_204], %123 {strides = array<i32>} : memref<32x128xf32, #tpu.memory_space<vmem>>, vector<4x4xf32>,
    %c0_205 = arith.constant 0 : index
    %c41 = arith.constant 41 : index
    %c0_206 = arith.constant 0 : index
    %c0_207 = arith.constant 0 : index
    %125 = vector.load %arg1[%c0_205, %c41, %c0_206, %c0_207] : memref<1x64x4x4xf32, #tpu.memory_space<vmem>>, vector<1x1x4x4xf32>
    %126 = vector.shape_cast %125 : vector<1x1x4x4xf32> to vector<4x4xf32>
    %c16_208 = arith.constant 16 : index
    %c36_209 = arith.constant 36 : index
    %127 = vector.load %arg5[%c16_208, %c36_209] : memref<32x128xf32, #tpu.memory_space<vmem>>, vector<4x4xf32>
    tpu.vector_store %arg5[%c16_208, %c36_209], %126 {strides = array<i32>} : memref<32x128xf32, #tpu.memory_space<vmem>>, vector<4x4xf32>,
    %c0_210 = arith.constant 0 : index
    %c42 = arith.constant 42 : index
    %c0_211 = arith.constant 0 : index
    %c0_212 = arith.constant 0 : index
    %128 = vector.load %arg1[%c0_210, %c42, %c0_211, %c0_212] : memref<1x64x4x4xf32, #tpu.memory_space<vmem>>, vector<1x1x4x4xf32>
    %129 = vector.shape_cast %128 : vector<1x1x4x4xf32> to vector<4x4xf32>
    %c16_213 = arith.constant 16 : index
    %c40_214 = arith.constant 40 : index
    %130 = vector.load %arg5[%c16_213, %c40_214] : memref<32x128xf32, #tpu.memory_space<vmem>>, vector<4x4xf32>
    tpu.vector_store %arg5[%c16_213, %c40_214], %129 {strides = array<i32>} : memref<32x128xf32, #tpu.memory_space<vmem>>, vector<4x4xf32>,
    %c0_215 = arith.constant 0 : index
    %c43 = arith.constant 43 : index
    %c0_216 = arith.constant 0 : index
    %c0_217 = arith.constant 0 : index
    %131 = vector.load %arg1[%c0_215, %c43, %c0_216, %c0_217] : memref<1x64x4x4xf32, #tpu.memory_space<vmem>>, vector<1x1x4x4xf32>
    %132 = vector.shape_cast %131 : vector<1x1x4x4xf32> to vector<4x4xf32>
    %c16_218 = arith.constant 16 : index
    %c44_219 = arith.constant 44 : index
    %133 = vector.load %arg5[%c16_218, %c44_219] : memref<32x128xf32, #tpu.memory_space<vmem>>, vector<4x4xf32>
    tpu.vector_store %arg5[%c16_218, %c44_219], %132 {strides = array<i32>} : memref<32x128xf32, #tpu.memory_space<vmem>>, vector<4x4xf32>,
    %c0_220 = arith.constant 0 : index
    %c44_221 = arith.constant 44 : index
    %c0_222 = arith.constant 0 : index
    %c0_223 = arith.constant 0 : index
    %134 = vector.load %arg1[%c0_220, %c44_221, %c0_222, %c0_223] : memref<1x64x4x4xf32, #tpu.memory_space<vmem>>, vector<1x1x4x4xf32>
    %135 = vector.shape_cast %134 : vector<1x1x4x4xf32> to vector<4x4xf32>
    %c24_224 = arith.constant 24 : index
    %c32_225 = arith.constant 32 : index
    %136 = vector.load %arg5[%c24_224, %c32_225] : memref<32x128xf32, #tpu.memory_space<vmem>>, vector<4x4xf32>
    tpu.vector_store %arg5[%c24_224, %c32_225], %135 {strides = array<i32>} : memref<32x128xf32, #tpu.memory_space<vmem>>, vector<4x4xf32>,
    %c0_226 = arith.constant 0 : index
    %c45 = arith.constant 45 : index
    %c0_227 = arith.constant 0 : index
    %c0_228 = arith.constant 0 : index
    %137 = vector.load %arg1[%c0_226, %c45, %c0_227, %c0_228] : memref<1x64x4x4xf32, #tpu.memory_space<vmem>>, vector<1x1x4x4xf32>
    %138 = vector.shape_cast %137 : vector<1x1x4x4xf32> to vector<4x4xf32>
    %c24_229 = arith.constant 24 : index
    %c36_230 = arith.constant 36 : index
    %139 = vector.load %arg5[%c24_229, %c36_230] : memref<32x128xf32, #tpu.memory_space<vmem>>, vector<4x4xf32>
    tpu.vector_store %arg5[%c24_229, %c36_230], %138 {strides = array<i32>} : memref<32x128xf32, #tpu.memory_space<vmem>>, vector<4x4xf32>,
    %c0_231 = arith.constant 0 : index
    %c46 = arith.constant 46 : index
    %c0_232 = arith.constant 0 : index
    %c0_233 = arith.constant 0 : index
    %140 = vector.load %arg1[%c0_231, %c46, %c0_232, %c0_233] : memref<1x64x4x4xf32, #tpu.memory_space<vmem>>, vector<1x1x4x4xf32>
    %141 = vector.shape_cast %140 : vector<1x1x4x4xf32> to vector<4x4xf32>
    %c24_234 = arith.constant 24 : index
    %c40_235 = arith.constant 40 : index
    %142 = vector.load %arg5[%c24_234, %c40_235] : memref<32x128xf32, #tpu.memory_space<vmem>>, vector<4x4xf32>
    tpu.vector_store %arg5[%c24_234, %c40_235], %141 {strides = array<i32>} : memref<32x128xf32, #tpu.memory_space<vmem>>, vector<4x4xf32>,
    %c0_236 = arith.constant 0 : index
    %c47 = arith.constant 47 : index
    %c0_237 = arith.constant 0 : index
    %c0_238 = arith.constant 0 : index
    %143 = vector.load %arg1[%c0_236, %c47, %c0_237, %c0_238] : memref<1x64x4x4xf32, #tpu.memory_space<vmem>>, vector<1x1x4x4xf32>
    %144 = vector.shape_cast %143 : vector<1x1x4x4xf32> to vector<4x4xf32>
    %c24_239 = arith.constant 24 : index
    %c44_240 = arith.constant 44 : index
    %145 = vector.load %arg5[%c24_239, %c44_240] : memref<32x128xf32, #tpu.memory_space<vmem>>, vector<4x4xf32>
    tpu.vector_store %arg5[%c24_239, %c44_240], %144 {strides = array<i32>} : memref<32x128xf32, #tpu.memory_space<vmem>>, vector<4x4xf32>,
    %c0_241 = arith.constant 0 : index
    %c48 = arith.constant 48 : index
    %c0_242 = arith.constant 0 : index
    %c0_243 = arith.constant 0 : index
    %146 = vector.load %arg1[%c0_241, %c48, %c0_242, %c0_243] : memref<1x64x4x4xf32, #tpu.memory_space<vmem>>, vector<1x1x4x4xf32>
    %147 = vector.shape_cast %146 : vector<1x1x4x4xf32> to vector<4x4xf32>
    %c0_244 = arith.constant 0 : index
    %c48_245 = arith.constant 48 : index
    %148 = vector.load %arg5[%c0_244, %c48_245] : memref<32x128xf32, #tpu.memory_space<vmem>>, vector<4x4xf32>
    tpu.vector_store %arg5[%c0_244, %c48_245], %147 {strides = array<i32>} : memref<32x128xf32, #tpu.memory_space<vmem>>, vector<4x4xf32>,
    %c0_246 = arith.constant 0 : index
    %c49 = arith.constant 49 : index
    %c0_247 = arith.constant 0 : index
    %c0_248 = arith.constant 0 : index
    %149 = vector.load %arg1[%c0_246, %c49, %c0_247, %c0_248] : memref<1x64x4x4xf32, #tpu.memory_space<vmem>>, vector<1x1x4x4xf32>
    %150 = vector.shape_cast %149 : vector<1x1x4x4xf32> to vector<4x4xf32>
    %c0_249 = arith.constant 0 : index
    %c52 = arith.constant 52 : index
    %151 = vector.load %arg5[%c0_249, %c52] : memref<32x128xf32, #tpu.memory_space<vmem>>, vector<4x4xf32>
    tpu.vector_store %arg5[%c0_249, %c52], %150 {strides = array<i32>} : memref<32x128xf32, #tpu.memory_space<vmem>>, vector<4x4xf32>,
    %c0_250 = arith.constant 0 : index
    %c50 = arith.constant 50 : index
    %c0_251 = arith.constant 0 : index
    %c0_252 = arith.constant 0 : index
    %152 = vector.load %arg1[%c0_250, %c50, %c0_251, %c0_252] : memref<1x64x4x4xf32, #tpu.memory_space<vmem>>, vector<1x1x4x4xf32>
    %153 = vector.shape_cast %152 : vector<1x1x4x4xf32> to vector<4x4xf32>
    %c0_253 = arith.constant 0 : index
    %c56 = arith.constant 56 : index
    %154 = vector.load %arg5[%c0_253, %c56] : memref<32x128xf32, #tpu.memory_space<vmem>>, vector<4x4xf32>
    tpu.vector_store %arg5[%c0_253, %c56], %153 {strides = array<i32>} : memref<32x128xf32, #tpu.memory_space<vmem>>, vector<4x4xf32>,
    %c0_254 = arith.constant 0 : index
    %c51 = arith.constant 51 : index
    %c0_255 = arith.constant 0 : index
    %c0_256 = arith.constant 0 : index
    %155 = vector.load %arg1[%c0_254, %c51, %c0_255, %c0_256] : memref<1x64x4x4xf32, #tpu.memory_space<vmem>>, vector<1x1x4x4xf32>
    %156 = vector.shape_cast %155 : vector<1x1x4x4xf32> to vector<4x4xf32>
    %c0_257 = arith.constant 0 : index
    %c60 = arith.constant 60 : index
    %157 = vector.load %arg5[%c0_257, %c60] : memref<32x128xf32, #tpu.memory_space<vmem>>, vector<4x4xf32>
    tpu.vector_store %arg5[%c0_257, %c60], %156 {strides = array<i32>} : memref<32x128xf32, #tpu.memory_space<vmem>>, vector<4x4xf32>,
    %c0_258 = arith.constant 0 : index
    %c52_259 = arith.constant 52 : index
    %c0_260 = arith.constant 0 : index
    %c0_261 = arith.constant 0 : index
    %158 = vector.load %arg1[%c0_258, %c52_259, %c0_260, %c0_261] : memref<1x64x4x4xf32, #tpu.memory_space<vmem>>, vector<1x1x4x4xf32>
    %159 = vector.shape_cast %158 : vector<1x1x4x4xf32> to vector<4x4xf32>
    %c8_262 = arith.constant 8 : index
    %c48_263 = arith.constant 48 : index
    %160 = vector.load %arg5[%c8_262, %c48_263] : memref<32x128xf32, #tpu.memory_space<vmem>>, vector<4x4xf32>
    tpu.vector_store %arg5[%c8_262, %c48_263], %159 {strides = array<i32>} : memref<32x128xf32, #tpu.memory_space<vmem>>, vector<4x4xf32>,
    %c0_264 = arith.constant 0 : index
    %c53 = arith.constant 53 : index
    %c0_265 = arith.constant 0 : index
    %c0_266 = arith.constant 0 : index
    %161 = vector.load %arg1[%c0_264, %c53, %c0_265, %c0_266] : memref<1x64x4x4xf32, #tpu.memory_space<vmem>>, vector<1x1x4x4xf32>
    %162 = vector.shape_cast %161 : vector<1x1x4x4xf32> to vector<4x4xf32>
    %c8_267 = arith.constant 8 : index
    %c52_268 = arith.constant 52 : index
    %163 = vector.load %arg5[%c8_267, %c52_268] : memref<32x128xf32, #tpu.memory_space<vmem>>, vector<4x4xf32>
    tpu.vector_store %arg5[%c8_267, %c52_268], %162 {strides = array<i32>} : memref<32x128xf32, #tpu.memory_space<vmem>>, vector<4x4xf32>,
    %c0_269 = arith.constant 0 : index
    %c54 = arith.constant 54 : index
    %c0_270 = arith.constant 0 : index
    %c0_271 = arith.constant 0 : index
    %164 = vector.load %arg1[%c0_269, %c54, %c0_270, %c0_271] : memref<1x64x4x4xf32, #tpu.memory_space<vmem>>, vector<1x1x4x4xf32>
    %165 = vector.shape_cast %164 : vector<1x1x4x4xf32> to vector<4x4xf32>
    %c8_272 = arith.constant 8 : index
    %c56_273 = arith.constant 56 : index
    %166 = vector.load %arg5[%c8_272, %c56_273] : memref<32x128xf32, #tpu.memory_space<vmem>>, vector<4x4xf32>
    tpu.vector_store %arg5[%c8_272, %c56_273], %165 {strides = array<i32>} : memref<32x128xf32, #tpu.memory_space<vmem>>, vector<4x4xf32>,
    %c0_274 = arith.constant 0 : index
    %c55 = arith.constant 55 : index
    %c0_275 = arith.constant 0 : index
    %c0_276 = arith.constant 0 : index
    %167 = vector.load %arg1[%c0_274, %c55, %c0_275, %c0_276] : memref<1x64x4x4xf32, #tpu.memory_space<vmem>>, vector<1x1x4x4xf32>
    %168 = vector.shape_cast %167 : vector<1x1x4x4xf32> to vector<4x4xf32>
    %c8_277 = arith.constant 8 : index
    %c60_278 = arith.constant 60 : index
    %169 = vector.load %arg5[%c8_277, %c60_278] : memref<32x128xf32, #tpu.memory_space<vmem>>, vector<4x4xf32>
    tpu.vector_store %arg5[%c8_277, %c60_278], %168 {strides = array<i32>} : memref<32x128xf32, #tpu.memory_space<vmem>>, vector<4x4xf32>,
    %c0_279 = arith.constant 0 : index
    %c56_280 = arith.constant 56 : index
    %c0_281 = arith.constant 0 : index
    %c0_282 = arith.constant 0 : index
    %170 = vector.load %arg1[%c0_279, %c56_280, %c0_281, %c0_282] : memref<1x64x4x4xf32, #tpu.memory_space<vmem>>, vector<1x1x4x4xf32>
    %171 = vector.shape_cast %170 : vector<1x1x4x4xf32> to vector<4x4xf32>
    %c16_283 = arith.constant 16 : index
    %c48_284 = arith.constant 48 : index
    %172 = vector.load %arg5[%c16_283, %c48_284] : memref<32x128xf32, #tpu.memory_space<vmem>>, vector<4x4xf32>
    tpu.vector_store %arg5[%c16_283, %c48_284], %171 {strides = array<i32>} : memref<32x128xf32, #tpu.memory_space<vmem>>, vector<4x4xf32>,
    %c0_285 = arith.constant 0 : index
    %c57 = arith.constant 57 : index
    %c0_286 = arith.constant 0 : index
    %c0_287 = arith.constant 0 : index
    %173 = vector.load %arg1[%c0_285, %c57, %c0_286, %c0_287] : memref<1x64x4x4xf32, #tpu.memory_space<vmem>>, vector<1x1x4x4xf32>
    %174 = vector.shape_cast %173 : vector<1x1x4x4xf32> to vector<4x4xf32>
    %c16_288 = arith.constant 16 : index
    %c52_289 = arith.constant 52 : index
    %175 = vector.load %arg5[%c16_288, %c52_289] : memref<32x128xf32, #tpu.memory_space<vmem>>, vector<4x4xf32>
    tpu.vector_store %arg5[%c16_288, %c52_289], %174 {strides = array<i32>} : memref<32x128xf32, #tpu.memory_space<vmem>>, vector<4x4xf32>,
    %c0_290 = arith.constant 0 : index
    %c58 = arith.constant 58 : index
    %c0_291 = arith.constant 0 : index
    %c0_292 = arith.constant 0 : index
    %176 = vector.load %arg1[%c0_290, %c58, %c0_291, %c0_292] : memref<1x64x4x4xf32, #tpu.memory_space<vmem>>, vector<1x1x4x4xf32>
    %177 = vector.shape_cast %176 : vector<1x1x4x4xf32> to vector<4x4xf32>
    %c16_293 = arith.constant 16 : index
    %c56_294 = arith.constant 56 : index
    %178 = vector.load %arg5[%c16_293, %c56_294] : memref<32x128xf32, #tpu.memory_space<vmem>>, vector<4x4xf32>
    tpu.vector_store %arg5[%c16_293, %c56_294], %177 {strides = array<i32>} : memref<32x128xf32, #tpu.memory_space<vmem>>, vector<4x4xf32>,
    %c0_295 = arith.constant 0 : index
    %c59 = arith.constant 59 : index
    %c0_296 = arith.constant 0 : index
    %c0_297 = arith.constant 0 : index
    %179 = vector.load %arg1[%c0_295, %c59, %c0_296, %c0_297] : memref<1x64x4x4xf32, #tpu.memory_space<vmem>>, vector<1x1x4x4xf32>
    %180 = vector.shape_cast %179 : vector<1x1x4x4xf32> to vector<4x4xf32>
    %c16_298 = arith.constant 16 : index
    %c60_299 = arith.constant 60 : index
    %181 = vector.load %arg5[%c16_298, %c60_299] : memref<32x128xf32, #tpu.memory_space<vmem>>, vector<4x4xf32>
    tpu.vector_store %arg5[%c16_298, %c60_299], %180 {strides = array<i32>} : memref<32x128xf32, #tpu.memory_space<vmem>>, vector<4x4xf32>,
    %c0_300 = arith.constant 0 : index
    %c60_301 = arith.constant 60 : index
    %c0_302 = arith.constant 0 : index
    %c0_303 = arith.constant 0 : index
    %182 = vector.load %arg1[%c0_300, %c60_301, %c0_302, %c0_303] : memref<1x64x4x4xf32, #tpu.memory_space<vmem>>, vector<1x1x4x4xf32>
    %183 = vector.shape_cast %182 : vector<1x1x4x4xf32> to vector<4x4xf32>
    %c24_304 = arith.constant 24 : index
    %c48_305 = arith.constant 48 : index
    %184 = vector.load %arg5[%c24_304, %c48_305] : memref<32x128xf32, #tpu.memory_space<vmem>>, vector<4x4xf32>
    tpu.vector_store %arg5[%c24_304, %c48_305], %183 {strides = array<i32>} : memref<32x128xf32, #tpu.memory_space<vmem>>, vector<4x4xf32>,
    %c0_306 = arith.constant 0 : index
    %c61 = arith.constant 61 : index
    %c0_307 = arith.constant 0 : index
    %c0_308 = arith.constant 0 : index
    %185 = vector.load %arg1[%c0_306, %c61, %c0_307, %c0_308] : memref<1x64x4x4xf32, #tpu.memory_space<vmem>>, vector<1x1x4x4xf32>
    %186 = vector.shape_cast %185 : vector<1x1x4x4xf32> to vector<4x4xf32>
    %c24_309 = arith.constant 24 : index
    %c52_310 = arith.constant 52 : index
    %187 = vector.load %arg5[%c24_309, %c52_310] : memref<32x128xf32, #tpu.memory_space<vmem>>, vector<4x4xf32>
    tpu.vector_store %arg5[%c24_309, %c52_310], %186 {strides = array<i32>} : memref<32x128xf32, #tpu.memory_space<vmem>>, vector<4x4xf32>,
    %c0_311 = arith.constant 0 : index
    %c62 = arith.constant 62 : index
    %c0_312 = arith.constant 0 : index
    %c0_313 = arith.constant 0 : index
    %188 = vector.load %arg1[%c0_311, %c62, %c0_312, %c0_313] : memref<1x64x4x4xf32, #tpu.memory_space<vmem>>, vector<1x1x4x4xf32>
    %189 = vector.shape_cast %188 : vector<1x1x4x4xf32> to vector<4x4xf32>
    %c24_314 = arith.constant 24 : index
    %c56_315 = arith.constant 56 : index
    %190 = vector.load %arg5[%c24_314, %c56_315] : memref<32x128xf32, #tpu.memory_space<vmem>>, vector<4x4xf32>
    tpu.vector_store %arg5[%c24_314, %c56_315], %189 {strides = array<i32>} : memref<32x128xf32, #tpu.memory_space<vmem>>, vector<4x4xf32>,
    %c0_316 = arith.constant 0 : index
    %c63 = arith.constant 63 : index
    %c0_317 = arith.constant 0 : index
    %c0_318 = arith.constant 0 : index
    %191 = vector.load %arg1[%c0_316, %c63, %c0_317, %c0_318] : memref<1x64x4x4xf32, #tpu.memory_space<vmem>>, vector<1x1x4x4xf32>
    %192 = vector.shape_cast %191 : vector<1x1x4x4xf32> to vector<4x4xf32>
    %c24_319 = arith.constant 24 : index
    %c60_320 = arith.constant 60 : index
    %193 = vector.load %arg5[%c24_319, %c60_320] : memref<32x128xf32, #tpu.memory_space<vmem>>, vector<4x4xf32>
    tpu.vector_store %arg5[%c24_319, %c60_320], %192 {strides = array<i32>} : memref<32x128xf32, #tpu.memory_space<vmem>>, vector<4x4xf32>,
    %c0_321 = arith.constant 0 : index
    %c0_322 = arith.constant 0 : index
    %194 = vector.load %arg5[%c0_321, %c0_322] : memref<32x128xf32, #tpu.memory_space<vmem>>, vector<32x128xf32>
    %195 = arith.truncf %194 : vector<32x128xf32> to vector<32x128xbf16>
    %c0_323 = arith.constant 0 : index
    %c0_324 = arith.constant 0 : index
    %196 = vector.load %arg2[%c0_323, %c0_324] : memref<128x128xbf16, #tpu.memory_space<vmem>>, vector<128x128xbf16>
    %cst_325 = arith.constant dense<0.000000e+00> : vector<32x128xf32>
    %197 = tpu.matmul %195, %196, %cst_325 {dimension_numbers = #tpu.dot_dimension_numbers<[1], [0], [0], [1], [0, 0, 1, 1], [], []>} : vector<32x128xbf16>, vector<128x128xbf16>, vector<32x128xf32> -> vector<32x128xf32>
    %c0_326 = arith.constant 0 : index
    %c0_327 = arith.constant 0 : index
    %198 = vector.load %arg3[%c0_326, %c0_327] : memref<1x128xf32, #tpu.memory_space<vmem>>, vector<1x128xf32>
    %199 = vector.extract_strided_slice %197 {offsets = [0, 0], sizes = [4, 128], strides = [1, 1]} : vector<32x128xf32> to vector<4x128xf32>
    %200 = vector.broadcast %198 : vector<1x128xf32> to vector<4x128xf32>
    %201 = arith.addf %199, %200 : vector<4x128xf32>
    %c0_328 = arith.constant 0 : index
    %c0_329 = arith.constant 0 : index
    %c0_330 = arith.constant 0 : index
    %c0_331 = arith.constant 0 : index
    %202 = vector.load %arg4[%c0_328, %c0_329, %c0_330, %c0_331] : memref<1x4x4x128xf32, #tpu.memory_space<vmem>>, vector<1x1x4x128xf32>
    %203 = vector.shape_cast %202 : vector<1x1x4x128xf32> to vector<4x128xf32>
    %204 = vector.shape_cast %201 : vector<4x128xf32> to vector<1x1x4x128xf32>
    tpu.vector_store %arg4[%c0_328, %c0_329, %c0_330, %c0_331], %204 {strides = array<i32>} : memref<1x4x4x128xf32, #tpu.memory_space<vmem>>, vector<1x1x4x128xf32>,
    %205 = vector.extract_strided_slice %197 {offsets = [8, 0], sizes = [4, 128], strides = [1, 1]} : vector<32x128xf32> to vector<4x128xf32>
    %206 = vector.broadcast %198 : vector<1x128xf32> to vector<4x128xf32>
    %207 = arith.addf %205, %206 : vector<4x128xf32>
    %c0_332 = arith.constant 0 : index
    %c1_333 = arith.constant 1 : index
    %c0_334 = arith.constant 0 : index
    %c0_335 = arith.constant 0 : index
    %208 = vector.load %arg4[%c0_332, %c1_333, %c0_334, %c0_335] : memref<1x4x4x128xf32, #tpu.memory_space<vmem>>, vector<1x1x4x128xf32>
    %209 = vector.shape_cast %208 : vector<1x1x4x128xf32> to vector<4x128xf32>
    %210 = vector.shape_cast %207 : vector<4x128xf32> to vector<1x1x4x128xf32>
    tpu.vector_store %arg4[%c0_332, %c1_333, %c0_334, %c0_335], %210 {strides = array<i32>} : memref<1x4x4x128xf32, #tpu.memory_space<vmem>>, vector<1x1x4x128xf32>,
    %211 = vector.extract_strided_slice %197 {offsets = [16, 0], sizes = [4, 128], strides = [1, 1]} : vector<32x128xf32> to vector<4x128xf32>
    %212 = vector.broadcast %198 : vector<1x128xf32> to vector<4x128xf32>
    %213 = arith.addf %211, %212 : vector<4x128xf32>
    %c0_336 = arith.constant 0 : index
    %c2_337 = arith.constant 2 : index
    %c0_338 = arith.constant 0 : index
    %c0_339 = arith.constant 0 : index
    %214 = vector.load %arg4[%c0_336, %c2_337, %c0_338, %c0_339] : memref<1x4x4x128xf32, #tpu.memory_space<vmem>>, vector<1x1x4x128xf32>
    %215 = vector.shape_cast %214 : vector<1x1x4x128xf32> to vector<4x128xf32>
    %216 = vector.shape_cast %213 : vector<4x128xf32> to vector<1x1x4x128xf32>
    tpu.vector_store %arg4[%c0_336, %c2_337, %c0_338, %c0_339], %216 {strides = array<i32>} : memref<1x4x4x128xf32, #tpu.memory_space<vmem>>, vector<1x1x4x128xf32>,
    %217 = vector.extract_strided_slice %197 {offsets = [24, 0], sizes = [4, 128], strides = [1, 1]} : vector<32x128xf32> to vector<4x128xf32>
    %218 = vector.broadcast %198 : vector<1x128xf32> to vector<4x128xf32>
    %219 = arith.addf %217, %218 : vector<4x128xf32>
    %c0_340 = arith.constant 0 : index
    %c3_341 = arith.constant 3 : index
    %c0_342 = arith.constant 0 : index
    %c0_343 = arith.constant 0 : index
    %220 = vector.load %arg4[%c0_340, %c3_341, %c0_342, %c0_343] : memref<1x4x4x128xf32, #tpu.memory_space<vmem>>, vector<1x1x4x128xf32>
    %221 = vector.shape_cast %220 : vector<1x1x4x128xf32> to vector<4x128xf32>
    %222 = vector.shape_cast %219 : vector<4x128xf32> to vector<1x1x4x128xf32>
    tpu.vector_store %arg4[%c0_340, %c3_341, %c0_342, %c0_343], %222 {strides = array<i32>} : memref<1x4x4x128xf32, #tpu.memory_space<vmem>>, vector<1x1x4x128xf32>,
    return
  }
  func.func @transform_0(%arg0: i32) -> (i32, i32, i32, i32) {
    %c0_i32 = arith.constant 0 : i32
    %c0_i32_0 = arith.constant 0 : i32
    %c0_i32_1 = arith.constant 0 : i32
    %c0_i32_2 = arith.constant 0 : i32
    return %arg0, %c0_i32, %c0_i32_0, %c0_i32_1 : i32, i32, i32, i32
  }
  func.func @transform_1(%arg0: i32) -> (i32, i32) {
    %c0_i32 = arith.constant 0 : i32
    %c0_i32_0 = arith.constant 0 : i32
    %c0_i32_1 = arith.constant 0 : i32
    return %c0_i32, %c0_i32_0 : i32, i32
  }
  func.func @transform_2(%arg0: i32) -> (i32, i32) {
    %c0_i32 = arith.constant 0 : i32
    %c0_i32_0 = arith.constant 0 : i32
    %c0_i32_1 = arith.constant 0 : i32
    return %c0_i32, %c0_i32_0 : i32, i32
  }
  func.func @transform_3(%arg0: i32) -> (i32, i32, i32, i32) {
    %c0_i32 = arith.constant 0 : i32
    %c0_i32_0 = arith.constant 0 : i32
    %c0_i32_1 = arith.constant 0 : i32
    %c0_i32_2 = arith.constant 0 : i32
    return %arg0, %c0_i32, %c0_i32_0, %c0_i32_1 : i32, i32, i32, i32
  }
}

</mosaic_0001>

<llo_original>
// kernel: patch_embedding.1
$region0: #{patch_embedding.1}
  #allocation0 [shape = 'u32[]', space=smem, size = 0x4, offset = 0x4, fixed_abs, tag = 'smem constant byte address 0x4 - core index']
  #allocation1 [shape = 'u32[144,128]{1,0:T(1,128)}', space=vmem, size = 0x12000, scoped, tag = 'internal scratch']
  #allocation2 [shape = 'f32[32,128]{1,0:T(8,128)}', space=vmem, size = 0x4000, scoped, tag = 'scratch operand']
  %s0 = inlined_call_operand.vmem [shape: f32[2,64,4,4], index: 0, kind: input, shape index: {}]
  %s1 = inlined_call_operand.vmem [shape: bf16[128,128], index: 1, kind: input, shape index: {}]
  %s2 = inlined_call_operand.vmem [shape: f32[1,128], index: 2, kind: input, shape index: {}]
  %s3 = inlined_call_operand.hbm [shape: f32[2,4,4,128], index: 3, kind: output, shape index: {}]
  %s4 = sld [smem:[#allocation0]]
  $region45: #{patch_embedding.1} parent=0
    _
  %s6 = ssub.s32 1, %s4
  %s7 = scalar_select 0, %s6, %s4
  $region1: #{patch_embedding.1} parent=0
    #allocation3 [shape = 'u8[16384]{0}', space=vmem, size = 0x4000, scoped, tag = 'output window, operand 0']
    #allocation4 [shape = 's32[2]{0}', space=sflag, size = 0x8, scoped, tag = 'scoped memory for patch_embedding.1']
    %8 = vsyncpa [#allocation4], 0
    %s9 = scalar_lea.sflag [#allocation4], 1
    %10 = vsyncpa %s9, 0
    loop: start=0, step=1, limit=4
    $region2: #{patch_embedding.1} parent=1 // loop_pre_header
      _
    $region3: #{patch_embedding.1} parent=1 // loop_header
      %s12 = sphi 0, %s16
      %p13 = scmp.ge.s32.totalorder %s12, 4
      %s22 = sphi 0, %s24
      %s25 = sphi 0, %s22
      %s26 = sphi 0, %s25
      %s42 = sphi 0, %s26
      %s46 = sphi 0, %s46
      %s48 = sphi 0, %s46
      %s49 = sphi 0, %s48
      %s63 = sphi 0, %s49
      %s67 = sphi 0, %s67
      %s69 = sphi 0, %s67
      %s70 = sphi 0, %s69
      %s84 = sphi 0, %s70
      %s90 = sphi 0, %s92
      %s93 = sphi 0, %s90
      %s94 = sphi 0, %s93
      %s110 = sphi 0, %s94
    $region4: #{patch_embedding.1} parent=1 // loop_header_branch
      %15 = sbr.rel (%p13) target = $region8
    $region5: #{patch_embedding.1} parent=1 // loop_body
      %s17 = ssub.s32 %s12, 1
      %s18 = ssub.s32 %s12, 2
      %s19 = sadd.s32 %s12, 1
      %s20 = ssub.s32 %s12, %s19
      %p21 = scmp.eq.s32.totalorder %s20, 0
      %s23 = sadd.s32 %s22, 1
      %s24 = scalar_select %p21, %s22, %s23
      %p27 = pneg %p21
      %p28 = scmp.eq.s32.totalorder %s12, 1
      %p29 = por %p27, %p28
      %p30 = scmp.ne.s32.totalorder %s22, %s25
      %p31 = scmp.eq.s32.totalorder %s12, 0
      %p32 = por %p30, %p31
      %p33 = scmp.ne.s32.totalorder %s22, %s25
      %p34 = scmp.eq.s32.totalorder %s17, 1
      %p35 = por %p33, %p34
      %p36 = scmp.ne.s32.totalorder %s25, %s26
      %p37 = scmp.eq.s32.totalorder %s17, 0
      %p38 = por %p36, %p37
      %p39 = scmp.ne.s32.totalorder %s25, %s26
      %p40 = scmp.eq.s32.totalorder %s18, 1
      %p41 = por %p39, %p40
      %p43 = scmp.ne.s32.totalorder %s26, %s42
      %p44 = scmp.eq.s32.totalorder %s18, 0
      %p45 = por %p43, %p44
      %s47 = sadd.s32 %s46, 1
      %p50 = scmp.eq.s32.totalorder %s12, 1
      %p51 = scmp.ne.s32.totalorder %s46, %s48
      %p52 = scmp.eq.s32.totalorder %s12, 0
      %p53 = por %p51, %p52
      %p54 = scmp.ne.s32.totalorder %s46, %s48
      %p55 = scmp.eq.s32.totalorder %s17, 1
      %p56 = por %p54, %p55
      %p57 = scmp.ne.s32.totalorder %s48, %s49
      %p58 = scmp.eq.s32.totalorder %s17, 0
      %p59 = por %p57, %p58
      %p60 = scmp.ne.s32.totalorder %s48, %s49
      %p61 = scmp.eq.s32.totalorder %s18, 1
      %p62 = por %p60, %p61
      %p64 = scmp.ne.s32.totalorder %s49, %s63
      %p65 = scmp.eq.s32.totalorder %s18, 0
      %p66 = por %p64, %p65
      %s68 = sadd.s32 %s67, 1
      %p71 = scmp.eq.s32.totalorder %s12, 1
      %p72 = scmp.ne.s32.totalorder %s67, %s69
      %p73 = scmp.eq.s32.totalorder %s12, 0
      %p74 = por %p72, %p73
      %p75 = scmp.ne.s32.totalorder %s67, %s69
      %p76 = scmp.eq.s32.totalorder %s17, 1
      %p77 = por %p75, %p76
      %p78 = scmp.ne.s32.totalorder %s69, %s70
      %p79 = scmp.eq.s32.totalorder %s17, 0
      %p80 = por %p78, %p79
      %p81 = scmp.ne.s32.totalorder %s69, %s70
      %p82 = scmp.eq.s32.totalorder %s18, 1
      %p83 = por %p81, %p82
      %p85 = scmp.ne.s32.totalorder %s70, %s84
      %p86 = scmp.eq.s32.totalorder %s18, 0
      %p87 = por %p85, %p86
      %s88 = ssub.s32 %s12, %s19
      %p89 = scmp.eq.s32.totalorder %s88, 0
      %s91 = sadd.s32 %s90, 1
      %s92 = scalar_select %p89, %s90, %s91
      %p95 = pneg %p89
      %p96 = scmp.eq.s32.totalorder %s12, 1
      %p97 = por %p95, %p96
      %p98 = scmp.ne.s32.totalorder %s90, %s93
      %p99 = scmp.eq.s32.totalorder %s12, 0
      %p100 = por %p98, %p99
      %p101 = scmp.ne.s32.totalorder %s90, %s93
      %p102 = scmp.eq.s32.totalorder %s17, 1
      %p103 = por %p101, %p102
      %p104 = scmp.ne.s32.totalorder %s93, %s94
      %p105 = scmp.eq.s32.totalorder %s17, 0
      %p106 = por %p104, %p105
      %p107 = scmp.ne.s32.totalorder %s93, %s94
      %p108 = scmp.eq.s32.totalorder %s18, 1
      %p109 = por %p107, %p108
      %p111 = scmp.ne.s32.totalorder %s94, %s110
      %p112 = scmp.eq.s32.totalorder %s18, 0
      %p113 = por %p111, %p112
      %p114 = scmp.le.s32.totalorder 1, %s12
      %p115 = scmp.lt.s32.totalorder %s12, 3
      %p116 = pnand %p114, %p115
      %p117 = pneg %p116
      // Predicated region
      $region9: #{patch_embedding.1} parent=5 // pred_check
        _
      $region10: #{patch_embedding.1} parent=5 // pred_check_branch
        %119 = sbr.rel (%p116) target = $region12
      $region11: #{patch_embedding.1} parent=5 // pred_region
        %s120 = ssub.s32 %s12, 1
        // Predicated region
        $region13: #{patch_embedding.1} parent=11 // pred_check
          %p121 = pneg %p59
        $region14: #{patch_embedding.1} parent=11 // pred_check_branch
          %123 = sbr.rel (%p121) target = $region16
        $region15: #{patch_embedding.1} parent=11 // pred_region
          _
        $region16: #{patch_embedding.1} parent=11 // pred_fallthru
          _
        // Predicated region
        $region17: #{patch_embedding.1} parent=11 // pred_check
          %p124 = pneg %p80
        $region18: #{patch_embedding.1} parent=11 // pred_check_branch
          %126 = sbr.rel (%p124) target = $region20
        $region19: #{patch_embedding.1} parent=11 // pred_region
          _
        $region20: #{patch_embedding.1} parent=11 // pred_fallthru
          _
      $region12: #{patch_embedding.1} parent=5 // pred_fallthru
        _
      %p127 = scmp.lt.s32.totalorder %s12, 2
      // Predicated region
      $region21: #{patch_embedding.1} parent=5 // pred_check
        %p128 = pneg %p127
      $region22: #{patch_embedding.1} parent=5 // pred_check_branch
        %130 = sbr.rel (%p128) target = $region24
      $region23: #{patch_embedding.1} parent=5 // pred_region
        // Predicated region
        $region25: #{patch_embedding.1} parent=23 // pred_check
          %p131 = pneg %p32
        $region26: #{patch_embedding.1} parent=23 // pred_check_branch
          %133 = sbr.rel (%p131) target = $region28
        $region27: #{patch_embedding.1} parent=23 // pred_region
          %p134 = scmp.lt.s32.totalorder %s12, 1
          %s135 = scalar_select %p134, %s12, 1
          %s136 = smul.addr %s135, 64
          %s137 = smul.addr %s136, 4
          %s138 = scalar_lea.vmem %s0, %s137
        $region28: #{patch_embedding.1} parent=23 // pred_fallthru
          _
      $region24: #{patch_embedding.1} parent=5 // pred_fallthru
        _
      %p139 = scmp.le.s32.totalorder 1, %s12
      %p140 = scmp.lt.s32.totalorder %s12, 3
      %p141 = pnand %p139, %p140
      %p142 = pneg %p141
      // Predicated region
      $region29: #{patch_embedding.1} parent=5 // pred_check
        _
      $region30: #{patch_embedding.1} parent=5 // pred_check_branch
        %144 = sbr.rel (%p141) target = $region32
      $region31: #{patch_embedding.1} parent=5 // pred_region
        %s145 = ssub.s32 %s12, 1
        %p146 = scmp.lt.s32.totalorder %s17, 1
        %s147 = scalar_select %p146, %s17, 1
        %s148 = smul.addr %s147, 64
        %s149 = smul.addr %s148, 4
        %s150 = scalar_lea.vmem %s0, %s149
        %p151 = pneg %p38
        %p152 = pneg %p35
        %p153 = pneg %p59
        %p154 = pneg %p56
        %p155 = pneg %p80
        %p156 = pneg %p77
        %p157 = pneg %p106
        %p158 = pneg %p103
        %s159 = sand.u32 %s93, 1
        %s160 = scalar_lea.sflag [#allocation4], %s159
        %s161 = sand.u32 %s93, 1
        %s162 = smul.addr %s161, 16
        %s163 = scalar_lea.vmem [#allocation3], %s162
        %p164 = scmp.lt.s32.totalorder %s17, 1
        %s165 = scalar_select %p164, %s17, 1
        %s166 = smul.addr %s165, 64
        %s167 = smul.addr %s166, 4
        %s168 = scalar_lea.vmem %s0, %s167
        %vm170 = vcmask 1048064
        %171 = vst.msk [vmem:[#allocation2] sm:$0xff] %vm170, 0.0
        %172 = vst.msk [vmem:[#allocation2 + $0x8] sm:$0xff] %vm170, 0.0
        %173 = vst.msk [vmem:[#allocation2 + $0x10] sm:$0xff] %vm170, 0.0
        %174 = vst.msk [vmem:[#allocation2 + $0x18] sm:$0xff] %vm170, 0.0
        %v175 = vld [vmem:[%s168] sm:$0xf]
        %vm176 = vcmask 27648
        %177 = vst.msk [vmem:[#allocation2] sm:$0xf] %vm176, %v175
        %s178 = scalar_lea.vmem %s168, 4
        %v179 = vld [vmem:[%s178] sm:$0xf]
        %181 = vrot.lane.b32.xlu0 %v179, 4
        %v182 = vpop.permute.xlu0 %181
        %vm184 = vcmask 60448
        %185 = vst.msk [vmem:[#allocation2] sm:$0xf] %vm184, %v182
        %s186 = scalar_lea.vmem %s168, 8
        %v187 = vld [vmem:[%s186] sm:$0xf]
        %189 = vrot.lane.b32.xlu0 %v187, 8
        %v190 = vpop.permute.xlu0 %189
        %vm192 = vcmask 93248
        %193 = vst.msk [vmem:[#allocation2] sm:$0xf] %vm192, %v190
        %s194 = scalar_lea.vmem %s168, 12
        %v195 = vld [vmem:[%s194] sm:$0xf]
        %197 = vrot.lane.b32.xlu0 %v195, 12
        %v198 = vpop.permute.xlu0 %197
        %vm200 = vcmask 126048
        %201 = vst.msk [vmem:[#allocation2] sm:$0xf] %vm200, %v198
        %s202 = scalar_lea.vmem %s168, 16
        %v203 = vld [vmem:[%s202] sm:$0xf]
        %204 = vst.msk [vmem:[#allocation2 + $0x8] sm:$0xf] %vm176, %v203
        %s205 = scalar_lea.vmem %s168, 20
        %v206 = vld [vmem:[%s205] sm:$0xf]
        %208 = vrot.lane.b32.xlu0 %v206, 4
        %v209 = vpop.permute.xlu0 %208
        %211 = vst.msk [vmem:[#allocation2 + $0x8] sm:$0xf] %vm184, %v209
        %s212 = scalar_lea.vmem %s168, 24
        %v213 = vld [vmem:[%s212] sm:$0xf]
        %215 = vrot.lane.b32.xlu0 %v213, 8
        %v216 = vpop.permute.xlu0 %215
        %218 = vst.msk [vmem:[#allocation2 + $0x8] sm:$0xf] %vm192, %v216
        %s219 = scalar_lea.vmem %s168, 28
        %v220 = vld [vmem:[%s219] sm:$0xf]
        %222 = vrot.lane.b32.xlu0 %v220, 12
        %v223 = vpop.permute.xlu0 %222
        %225 = vst.msk [vmem:[#allocation2 + $0x8] sm:$0xf] %vm200, %v223
        %s226 = scalar_lea.vmem %s168, 32
        %v227 = vld [vmem:[%s226] sm:$0xf]
        %228 = vst.msk [vmem:[#allocation2 + $0x10] sm:$0xf] %vm176, %v227
        %s229 = scalar_lea.vmem %s168, 36
        %v230 = vld [vmem:[%s229] sm:$0xf]
        %232 = vrot.lane.b32.xlu0 %v230, 4
        %v233 = vpop.permute.xlu0 %232
        %235 = vst.msk [vmem:[#allocation2 + $0x10] sm:$0xf] %vm184, %v233
        %s236 = scalar_lea.vmem %s168, 40
        %v237 = vld [vmem:[%s236] sm:$0xf]
        %239 = vrot.lane.b32.xlu0 %v237, 8
        %v240 = vpop.permute.xlu0 %239
        %242 = vst.msk [vmem:[#allocation2 + $0x10] sm:$0xf] %vm192, %v240
        %s243 = scalar_lea.vmem %s168, 44
        %v244 = vld [vmem:[%s243] sm:$0xf]
        %246 = vrot.lane.b32.xlu0 %v244, 12
        %v247 = vpop.permute.xlu0 %246
        %249 = vst.msk [vmem:[#allocation2 + $0x10] sm:$0xf] %vm200, %v247
        %s250 = scalar_lea.vmem %s168, 48
        %v251 = vld [vmem:[%s250] sm:$0xf]
        %252 = vst.msk [vmem:[#allocation2 + $0x18] sm:$0xf] %vm176, %v251
        %s253 = scalar_lea.vmem %s168, 52
        %v254 = vld [vmem:[%s253] sm:$0xf]
        %256 = vrot.lane.b32.xlu0 %v254, 4
        %v257 = vpop.permute.xlu0 %256
        %259 = vst.msk [vmem:[#allocation2 + $0x18] sm:$0xf] %vm184, %v257
        %s260 = scalar_lea.vmem %s168, 56
        %v261 = vld [vmem:[%s260] sm:$0xf]
        %263 = vrot.lane.b32.xlu0 %v261, 8
        %v264 = vpop.permute.xlu0 %263
        %266 = vst.msk [vmem:[#allocation2 + $0x18] sm:$0xf] %vm192, %v264
        %s267 = scalar_lea.vmem %s168, 60
        %v268 = vld [vmem:[%s267] sm:$0xf]
        %270 = vrot.lane.b32.xlu0 %v268, 12
        %v271 = vpop.permute.xlu0 %270
        %273 = vst.msk [vmem:[#allocation2 + $0x18] sm:$0xf] %vm200, %v271
        %s274 = scalar_lea.vmem %s168, 64
        %v275 = vld [vmem:[%s274] sm:$0xf]
        %277 = vrot.lane.b32.xlu0 %v275, 16
        %v278 = vpop.permute.xlu0 %277
        %vm280 = vcmask 158848
        %281 = vst.msk [vmem:[#allocation2] sm:$0xf] %vm280, %v278
        %s282 = scalar_lea.vmem %s168, 68
        %v283 = vld [vmem:[%s282] sm:$0xf]
        %285 = vrot.lane.b32.xlu0 %v283, 20
        %v286 = vpop.permute.xlu0 %285
        %vm288 = vcmask 191648
        %289 = vst.msk [vmem:[#allocation2] sm:$0xf] %vm288, %v286
        %s290 = scalar_lea.vmem %s168, 72
        %v291 = vld [vmem:[%s290] sm:$0xf]
        %293 = vrot.lane.b32.xlu0 %v291, 24
        %v294 = vpop.permute.xlu0 %293
        %vm296 = vcmask 224448
        %297 = vst.msk [vmem:[#allocation2] sm:$0xf] %vm296, %v294
        %s298 = scalar_lea.vmem %s168, 76
        %v299 = vld [vmem:[%s298] sm:$0xf]
        %301 = vrot.lane.b32.xlu0 %v299, 28
        %v302 = vpop.permute.xlu0 %301
        %vm304 = vcmask 257248
        %305 = vst.msk [vmem:[#allocation2] sm:$0xf] %vm304, %v302
        %s306 = scalar_lea.vmem %s168, 80
        %v307 = vld [vmem:[%s306] sm:$0xf]
        %309 = vrot.lane.b32.xlu0 %v307, 16
        %v310 = vpop.permute.xlu0 %309
        %312 = vst.msk [vmem:[#allocation2 + $0x8] sm:$0xf] %vm280, %v310
        %s313 = scalar_lea.vmem %s168, 84
        %v314 = vld [vmem:[%s313] sm:$0xf]
        %316 = vrot.lane.b32.xlu0 %v314, 20
        %v317 = vpop.permute.xlu0 %316
        %319 = vst.msk [vmem:[#allocation2 + $0x8] sm:$0xf] %vm288, %v317
        %s320 = scalar_lea.vmem %s168, 88
        %v321 = vld [vmem:[%s320] sm:$0xf]
        %323 = vrot.lane.b32.xlu0 %v321, 24
        %v324 = vpop.permute.xlu0 %323
        %326 = vst.msk [vmem:[#allocation2 + $0x8] sm:$0xf] %vm296, %v324
        %s327 = scalar_lea.vmem %s168, 92
        %v328 = vld [vmem:[%s327] sm:$0xf]
        %330 = vrot.lane.b32.xlu0 %v328, 28
        %v331 = vpop.permute.xlu0 %330
        %333 = vst.msk [vmem:[#allocation2 + $0x8] sm:$0xf] %vm304, %v331
        %s334 = scalar_lea.vmem %s168, 96
        %v335 = vld [vmem:[%s334] sm:$0xf]
        %337 = vrot.lane.b32.xlu0 %v335, 16
        %v338 = vpop.permute.xlu0 %337
        %340 = vst.msk [vmem:[#allocation2 + $0x10] sm:$0xf] %vm280, %v338
        %s341 = scalar_lea.vmem %s168, 100
        %v342 = vld [vmem:[%s341] sm:$0xf]
        %344 = vrot.lane.b32.xlu0 %v342, 20
        %v345 = vpop.permute.xlu0 %344
        %347 = vst.msk [vmem:[#allocation2 + $0x10] sm:$0xf] %vm288, %v345
        %s348 = scalar_lea.vmem %s168, 104
        %v349 = vld [vmem:[%s348] sm:$0xf]
        %351 = vrot.lane.b32.xlu0 %v349, 24
        %v352 = vpop.permute.xlu0 %351
        %354 = vst.msk [vmem:[#allocation2 + $0x10] sm:$0xf] %vm296, %v352
        %s355 = scalar_lea.vmem %s168, 108
        %v356 = vld [vmem:[%s355] sm:$0xf]
        %358 = vrot.lane.b32.xlu0 %v356, 28
        %v359 = vpop.permute.xlu0 %358
        %361 = vst.msk [vmem:[#allocation2 + $0x10] sm:$0xf] %vm304, %v359
        %s362 = scalar_lea.vmem %s168, 112
        %v363 = vld [vmem:[%s362] sm:$0xf]
        %365 = vrot.lane.b32.xlu0 %v363, 16
        %v366 = vpop.permute.xlu0 %365
        %368 = vst.msk [vmem:[#allocation2 + $0x18] sm:$0xf] %vm280, %v366
        %s369 = scalar_lea.vmem %s168, 116
        %v370 = vld [vmem:[%s369] sm:$0xf]
        %372 = vrot.lane.b32.xlu0 %v370, 20
        %v373 = vpop.permute.xlu0 %372
        %375 = vst.msk [vmem:[#allocation2 + $0x18] sm:$0xf] %vm288, %v373
        %s376 = scalar_lea.vmem %s168, 120
        %v377 = vld [vmem:[%s376] sm:$0xf]
        %379 = vrot.lane.b32.xlu0 %v377, 24
        %v380 = vpop.permute.xlu0 %379
        %382 = vst.msk [vmem:[#allocation2 + $0x18] sm:$0xf] %vm296, %v380
        %s383 = scalar_lea.vmem %s168, 124
        %v384 = vld [vmem:[%s383] sm:$0xf]
        %386 = vrot.lane.b32.xlu0 %v384, 28
        %v387 = vpop.permute.xlu0 %386
        %389 = vst.msk [vmem:[#allocation2 + $0x18] sm:$0xf] %vm304, %v387
        %s390 = scalar_lea.vmem %s168, 128
        %v391 = vld [vmem:[%s390] sm:$0xf]
        %393 = vrot.lane.b32.xlu0 %v391, 32
        %v394 = vpop.permute.xlu0 %393
        %vm396 = vcmask 290048
        %397 = vst.msk [vmem:[#allocation2] sm:$0xf] %vm396, %v394
        %s398 = scalar_lea.vmem %s168, 132
        %v399 = vld [vmem:[%s398] sm:$0xf]
        %401 = vrot.lane.b32.xlu0 %v399, 36
        %v402 = vpop.permute.xlu0 %401
        %vm404 = vcmask 322848
        %405 = vst.msk [vmem:[#allocation2] sm:$0xf] %vm404, %v402
        %s406 = scalar_lea.vmem %s168, 136
        %v407 = vld [vmem:[%s406] sm:$0xf]
        %409 = vrot.lane.b32.xlu0 %v407, 40
        %v410 = vpop.permute.xlu0 %409
        %vm412 = vcmask 355648
        %413 = vst.msk [vmem:[#allocation2] sm:$0xf] %vm412, %v410
        %s414 = scalar_lea.vmem %s168, 140
        %v415 = vld [vmem:[%s414] sm:$0xf]
        %417 = vrot.lane.b32.xlu0 %v415, 44
        %v418 = vpop.permute.xlu0 %417
        %vm420 = vcmask 388448
        %421 = vst.msk [vmem:[#allocation2] sm:$0xf] %vm420, %v418
        %s422 = scalar_lea.vmem %s168, 144
        %v423 = vld [vmem:[%s422] sm:$0xf]
        %425 = vrot.lane.b32.xlu0 %v423, 32
        %v426 = vpop.permute.xlu0 %425
        %428 = vst.msk [vmem:[#allocation2 + $0x8] sm:$0xf] %vm396, %v426
        %s429 = scalar_lea.vmem %s168, 148
        %v430 = vld [vmem:[%s429] sm:$0xf]
        %432 = vrot.lane.b32.xlu0 %v430, 36
        %v433 = vpop.permute.xlu0 %432
        %435 = vst.msk [vmem:[#allocation2 + $0x8] sm:$0xf] %vm404, %v433
        %s436 = scalar_lea.vmem %s168, 152
        %v437 = vld [vmem:[%s436] sm:$0xf]
        %439 = vrot.lane.b32.xlu0 %v437, 40
        %v440 = vpop.permute.xlu0 %439
        %442 = vst.msk [vmem:[#allocation2 + $0x8] sm:$0xf] %vm412, %v440
        %s443 = scalar_lea.vmem %s168, 156
        %v444 = vld [vmem:[%s443] sm:$0xf]
        %446 = vrot.lane.b32.xlu0 %v444, 44
        %v447 = vpop.permute.xlu0 %446
        %449 = vst.msk [vmem:[#allocation2 + $0x8] sm:$0xf] %vm420, %v447
        %s450 = scalar_lea.vmem %s168, 160
        %v451 = vld [vmem:[%s450] sm:$0xf]
        %453 = vrot.lane.b32.xlu0 %v451, 32
        %v454 = vpop.permute.xlu0 %453
        %456 = vst.msk [vmem:[#allocation2 + $0x10] sm:$0xf] %vm396, %v454
        %s457 = scalar_lea.vmem %s168, 164
        %v458 = vld [vmem:[%s457] sm:$0xf]
        %460 = vrot.lane.b32.xlu0 %v458, 36
        %v461 = vpop.permute.xlu0 %460
        %463 = vst.msk [vmem:[#allocation2 + $0x10] sm:$0xf] %vm404, %v461
        %s464 = scalar_lea.vmem %s168, 168
        %v465 = vld [vmem:[%s464] sm:$0xf]
        %467 = vrot.lane.b32.xlu0 %v465, 40
        %v468 = vpop.permute.xlu0 %467
        %470 = vst.msk [vmem:[#allocation2 + $0x10] sm:$0xf] %vm412, %v468
        %s471 = scalar_lea.vmem %s168, 172
        %v472 = vld [vmem:[%s471] sm:$0xf]
        %474 = vrot.lane.b32.xlu0 %v472, 44
        %v475 = vpop.permute.xlu0 %474
        %477 = vst.msk [vmem:[#allocation2 + $0x10] sm:$0xf] %vm420, %v475
        %s478 = scalar_lea.vmem %s168, 176
        %v479 = vld [vmem:[%s478] sm:$0xf]
        %481 = vrot.lane.b32.xlu0 %v479, 32
        %v482 = vpop.permute.xlu0 %481
        %484 = vst.msk [vmem:[#allocation2 + $0x18] sm:$0xf] %vm396, %v482
        %s485 = scalar_lea.vmem %s168, 180
        %v486 = vld [vmem:[%s485] sm:$0xf]
        %488 = vrot.lane.b32.xlu0 %v486, 36
        %v489 = vpop.permute.xlu0 %488
        %491 = vst.msk [vmem:[#allocation2 + $0x18] sm:$0xf] %vm404, %v489
        %s492 = scalar_lea.vmem %s168, 184
        %v493 = vld [vmem:[%s492] sm:$0xf]
        %495 = vrot.lane.b32.xlu0 %v493, 40
        %v496 = vpop.permute.xlu0 %495
        %498 = vst.msk [vmem:[#allocation2 + $0x18] sm:$0xf] %vm412, %v496
        %s499 = scalar_lea.vmem %s168, 188
        %v500 = vld [vmem:[%s499] sm:$0xf]
        %502 = vrot.lane.b32.xlu0 %v500, 44
        %v503 = vpop.permute.xlu0 %502
        %505 = vst.msk [vmem:[#allocation2 + $0x18] sm:$0xf] %vm420, %v503
        %s506 = scalar_lea.vmem %s168, 192
        %v507 = vld [vmem:[%s506] sm:$0xf]
        %509 = vrot.lane.b32.xlu0 %v507, 48
        %v510 = vpop.permute.xlu0 %509
        %vm512 = vcmask 421248
        %513 = vst.msk [vmem:[#allocation2] sm:$0xf] %vm512, %v510
        %s514 = scalar_lea.vmem %s168, 196
        %v515 = vld [vmem:[%s514] sm:$0xf]
        %517 = vrot.lane.b32.xlu0 %v515, 52
        %v518 = vpop.permute.xlu0 %517
        %vm520 = vcmask 454048
        %521 = vst.msk [vmem:[#allocation2] sm:$0xf] %vm520, %v518
        %s522 = scalar_lea.vmem %s168, 200
        %v523 = vld [vmem:[%s522] sm:$0xf]
        %525 = vrot.lane.b32.xlu0 %v523, 56
        %v526 = vpop.permute.xlu0 %525
        %vm528 = vcmask 486848
        %529 = vst.msk [vmem:[#allocation2] sm:$0xf] %vm528, %v526
        %s530 = scalar_lea.vmem %s168, 204
        %v531 = vld [vmem:[%s530] sm:$0xf]
        %533 = vrot.lane.b32.xlu0 %v531, 60
        %v534 = vpop.permute.xlu0 %533
        %vm536 = vcmask 519648
        %537 = vst.msk [vmem:[#allocation2] sm:$0xf] %vm536, %v534
        %s538 = scalar_lea.vmem %s168, 208
        %v539 = vld [vmem:[%s538] sm:$0xf]
        %541 = vrot.lane.b32.xlu0 %v539, 48
        %v542 = vpop.permute.xlu0 %541
        %544 = vst.msk [vmem:[#allocation2 + $0x8] sm:$0xf] %vm512, %v542
        %s545 = scalar_lea.vmem %s168, 212
        %v546 = vld [vmem:[%s545] sm:$0xf]
        %548 = vrot.lane.b32.xlu0 %v546, 52
        %v549 = vpop.permute.xlu0 %548
        %551 = vst.msk [vmem:[#allocation2 + $0x8] sm:$0xf] %vm520, %v549
        %s552 = scalar_lea.vmem %s168, 216
        %v553 = vld [vmem:[%s552] sm:$0xf]
        %555 = vrot.lane.b32.xlu0 %v553, 56
        %v556 = vpop.permute.xlu0 %555
        %558 = vst.msk [vmem:[#allocation2 + $0x8] sm:$0xf] %vm528, %v556
        %s559 = scalar_lea.vmem %s168, 220
        %v560 = vld [vmem:[%s559] sm:$0xf]
        %562 = vrot.lane.b32.xlu0 %v560, 60
        %v563 = vpop.permute.xlu0 %562
        %565 = vst.msk [vmem:[#allocation2 + $0x8] sm:$0xf] %vm536, %v563
        %s566 = scalar_lea.vmem %s168, 224
        %v567 = vld [vmem:[%s566] sm:$0xf]
        %569 = vrot.lane.b32.xlu0 %v567, 48
        %v570 = vpop.permute.xlu0 %569
        %572 = vst.msk [vmem:[#allocation2 + $0x10] sm:$0xf] %vm512, %v570
        %s573 = scalar_lea.vmem %s168, 228
        %v574 = vld [vmem:[%s573] sm:$0xf]
        %576 = vrot.lane.b32.xlu0 %v574, 52
        %v577 = vpop.permute.xlu0 %576
        %579 = vst.msk [vmem:[#allocation2 + $0x10] sm:$0xf] %vm520, %v577
        %s580 = scalar_lea.vmem %s168, 232
        %v581 = vld [vmem:[%s580] sm:$0xf]
        %583 = vrot.lane.b32.xlu0 %v581, 56
        %v584 = vpop.permute.xlu0 %583
        %586 = vst.msk [vmem:[#allocation2 + $0x10] sm:$0xf] %vm528, %v584
        %s587 = scalar_lea.vmem %s168, 236
        %v588 = vld [vmem:[%s587] sm:$0xf]
        %590 = vrot.lane.b32.xlu0 %v588, 60
        %v591 = vpop.permute.xlu0 %590
        %593 = vst.msk [vmem:[#allocation2 + $0x10] sm:$0xf] %vm536, %v591
        %s594 = scalar_lea.vmem %s168, 240
        %v595 = vld [vmem:[%s594] sm:$0xf]
        %597 = vrot.lane.b32.xlu0 %v595, 48
        %v598 = vpop.permute.xlu0 %597
        %600 = vst.msk [vmem:[#allocation2 + $0x18] sm:$0xf] %vm512, %v598
        %s601 = scalar_lea.vmem %s168, 244
        %v602 = vld [vmem:[%s601] sm:$0xf]
        %604 = vrot.lane.b32.xlu0 %v602, 52
        %v605 = vpop.permute.xlu0 %604
        %607 = vst.msk [vmem:[#allocation2 + $0x18] sm:$0xf] %vm520, %v605
        %s608 = scalar_lea.vmem %s168, 248
        %v609 = vld [vmem:[%s608] sm:$0xf]
        %611 = vrot.lane.b32.xlu0 %v609, 56
        %v612 = vpop.permute.xlu0 %611
        %614 = vst.msk [vmem:[#allocation2 + $0x18] sm:$0xf] %vm528, %v612
        %s615 = scalar_lea.vmem %s168, 252
        %v616 = vld [vmem:[%s615] sm:$0xf]
        %618 = vrot.lane.b32.xlu0 %v616, 60
        %v619 = vpop.permute.xlu0 %618
        %621 = vst.msk [vmem:[#allocation2 + $0x18] sm:$0xf] %vm536, %v619
        %v622 = vld [vmem:[#allocation2] sm:$0xff]
        %v623 = vld [vmem:[#allocation2 + $0x8] sm:$0xff]
        %v624 = vld [vmem:[#allocation2 + $0x10] sm:$0xff]
        %v625 = vld [vmem:[#allocation2 + $0x18] sm:$0xff]
        %v626 = vpack.c.bf16 %v623, %v622
        %v627 = vpack.c.bf16 %v625, %v624
        %v628 = vld [vmem:[%s1] sm:$0xf]
        %v629 = vld [vmem:[%s1 + $0x4] sm:$0xf]
        %v630 = vld [vmem:[%s1 + $0x8] sm:$0xf]
        %v631 = vld [vmem:[%s1 + $0xc] sm:$0xf]
        %v632 = vld [vmem:[%s1 + $0x10] sm:$0xf]
        %v633 = vld [vmem:[%s1 + $0x14] sm:$0xf]
        %v634 = vld [vmem:[%s1 + $0x18] sm:$0xf]
        %v635 = vld [vmem:[%s1 + $0x1c] sm:$0xf]
        %v636 = vld [vmem:[%s1 + $0x20] sm:$0xf]
        %v637 = vld [vmem:[%s1 + $0x24] sm:$0xf]
        %v638 = vld [vmem:[%s1 + $0x28] sm:$0xf]
        %v639 = vld [vmem:[%s1 + $0x2c] sm:$0xf]
        %v640 = vld [vmem:[%s1 + $0x30] sm:$0xf]
        %v641 = vld [vmem:[%s1 + $0x34] sm:$0xf]
        %v642 = vld [vmem:[%s1 + $0x38] sm:$0xf]
        %v643 = vld [vmem:[%s1 + $0x3c] sm:$0xf]
        %v660 = vunpack.c.l.b16 %v628
        %v661 = vunpack.c.l.b16 %v629
        %v662 = vunpack.c.l.b16 %v630
        %v663 = vunpack.c.l.b16 %v631
        %v664 = vunpack.c.l.b16 %v632
        %v665 = vunpack.c.l.b16 %v633
        %v666 = vunpack.c.l.b16 %v634
        %v667 = vunpack.c.l.b16 %v635
        %v668 = vunpack.c.l.b16 %v636
        %v669 = vunpack.c.l.b16 %v637
        %v670 = vunpack.c.l.b16 %v638
        %v671 = vunpack.c.l.b16 %v639
        %v672 = vunpack.c.l.b16 %v640
        %v673 = vunpack.c.l.b16 %v641
        %v674 = vunpack.c.l.b16 %v642
        %v675 = vunpack.c.l.b16 %v643
        %v676 = vpack.c.b16 %v661, %v660
        %v677 = vpack.c.b16 %v663, %v662
        %v678 = vpack.c.b16 %v665, %v664
        %v679 = vpack.c.b16 %v667, %v666
        %v680 = vpack.c.b16 %v669, %v668
        %v681 = vpack.c.b16 %v671, %v670
        %v682 = vpack.c.b16 %v673, %v672
        %v683 = vpack.c.b16 %v675, %v674
        %692 = vmatprep.subr.bf16.mxu0 0
        %693 = vmatpush1.bf16.msra.mxu0 %v683
        %694 = vmatprep.subr.bf16.mxu0 0
        %695 = vmatpush1.bf16.msra.mxu0 %v682
        %696 = vmatprep.subr.bf16.mxu0 0
        %697 = vmatpush1.bf16.msra.mxu0 %v681
        %698 = vmatprep.subr.bf16.mxu0 0
        %699 = vmatpush1.bf16.msra.mxu0 %v680
        %700 = vmatprep.subr.bf16.mxu0 0
        %701 = vmatpush1.bf16.msra.mxu0 %v679
        %702 = vmatprep.subr.bf16.mxu0 0
        %703 = vmatpush1.bf16.msra.mxu0 %v678
        %704 = vmatprep.subr.bf16.mxu0 0
        %705 = vmatpush1.bf16.msra.mxu0 %v677
        %706 = vmatprep.subr.bf16.mxu0 0
        %707 = vmatpush1.bf16.msra.mxu0 %v676
        %708 = vmatprep.subr.bf16.mxu0 0
        %709 = vmatpush2.bf16.msra.mxu0 0
        %710 = vmatprep.subr.bf16.mxu0 0
        %711 = vmatpush2.bf16.msra.mxu0 0
        %712 = vmatprep.subr.bf16.mxu0 0
        %713 = vmatpush2.bf16.msra.mxu0 0
        %714 = vmatprep.subr.bf16.mxu0 0
        %715 = vmatpush2.bf16.msra.mxu0 0
        %716 = vmatprep.subr.bf16.mxu0 0
        %717 = vmatpush2.bf16.msra.mxu0 0
        %718 = vmatprep.subr.bf16.mxu0 0
        %719 = vmatpush2.bf16.msra.mxu0 0
        %720 = vmatprep.subr.bf16.mxu0 0
        %721 = vmatpush2.bf16.msra.mxu0 0
        %722 = vmatprep.subr.bf16.mxu0 0
        %723 = vmatpush2.bf16.msra.mxu0 0
        %724 = vmatprep.mubr.bf16.mxu0 0
        %725 = vmatmul.mubr.bf16.gmra.mxu0 %v626
        %v726 = vpop.f32.mrf.mxu0
        %v727 = vadd.f32 0.0, %v726
        %v728 = vpop.f32.mrf.mxu0
        %v729 = vpop.f32.mrf.mxu0
        %v730 = vadd.f32 0.0, %v729
        %v731 = vpop.f32.mrf.mxu0
        %732 = vmatprep.mubr.bf16.mxu0 0
        %733 = vmatmul.mubr.bf16.gmra.mxu0 %v627
        %v734 = vpop.f32.mrf.mxu0
        %v735 = vadd.f32 0.0, %v734
        %v736 = vpop.f32.mrf.mxu0
        %v737 = vpop.f32.mrf.mxu0
        %v738 = vadd.f32 0.0, %v737
        %v739 = vpop.f32.mrf.mxu0
        %740 = vdwg.mxu0
        %v741 = vld [vmem:[%s2] sm:$0x1]
        %v743 = vlaneseq
        %v744 = vshrl.u32 %v743, 7
        %v745 = vsub.s32 0, %v744
        %v746 = vrot.slane %v741, %v745
        %v748 = vadd.f32 %v727, %v746
        %749 = vst [vmem:[%s163] sm:$0xf] %v748
        %v750 = vadd.f32 %v730, %v746
        %s751 = scalar_lea.vmem %s163, 4 [#allocation3]
        %752 = vst [vmem:[%s751] sm:$0xf] %v750
        %v753 = vadd.f32 %v735, %v746
        %s754 = scalar_lea.vmem %s163, 8 [#allocation3]
        %755 = vst [vmem:[%s754] sm:$0xf] %v753
        %v756 = vadd.f32 %v738, %v746
        %s757 = scalar_lea.vmem %s163, 12 [#allocation3]
        %758 = vst [vmem:[%s757] sm:$0xf] %v756
        %s759 = sand.u32 %s93, 1
        %s760 = scalar_lea.sflag [#allocation4], %s759
        %s761 = sand.u32 %s93, 1
        %s762 = smul.addr %s761, 16
        %s763 = scalar_lea.vmem [#allocation3], %s762
        // Predicated region
        $region33: #{patch_embedding.1} parent=31 // pred_check
          %p764 = pneg %p103
        $region34: #{patch_embedding.1} parent=31 // pred_check_branch
          %766 = sbr.rel (%p764) target = $region36
        $region35: #{patch_embedding.1} parent=31 // pred_region
          %s768 = ssub.s32 256, 256
          %769 = vsyncadd %s760, %s768
          %s770 = smul.addr %s17, 4
          %s771 = smul.addr %s770, 64
          %s772 = scalar_lea.hbm %s3, %s771
          %s773 = sshll.u32 %s763, 4
          %s774 = int_to_ptr.vmem [resolvable:$true] %s773
          %779 = dma.vmem_to_hbm [thread:$0]  %s774, 256, %s772, %s760, 64, 64, 4
        $region36: #{patch_embedding.1} parent=31 // pred_fallthru
          _
      $region32: #{patch_embedding.1} parent=5 // pred_fallthru
        _
      %p780 = scmp.le.s32.totalorder 2, %s12
      // Predicated region
      $region37: #{patch_embedding.1} parent=5 // pred_check
        %p781 = pneg %p780
      $region38: #{patch_embedding.1} parent=5 // pred_check_branch
        %783 = sbr.rel (%p781) target = $region40
      $region39: #{patch_embedding.1} parent=5 // pred_region
        %s784 = ssub.s32 %s12, 2
        // Predicated region
        $region41: #{patch_embedding.1} parent=39 // pred_check
          %p785 = pneg %p109
        $region42: #{patch_embedding.1} parent=39 // pred_check_branch
          %787 = sbr.rel (%p785) target = $region44
        $region43: #{patch_embedding.1} parent=39 // pred_region
          %s788 = sand.u32 %s94, 1
          %s789 = scalar_lea.sflag [#allocation4], %s788
          %s790 = sand.u32 %s94, 1
          %s791 = smul.addr %s790, 16
          %s792 = scalar_lea.vmem [#allocation3], %s791
          %793 = dma.done %s789, 256
        $region44: #{patch_embedding.1} parent=39 // pred_fallthru
          _
      $region40: #{patch_embedding.1} parent=5 // pred_fallthru
        _
    $region6: #{patch_embedding.1} parent=1 // loop_footer
      %s16 = sadd.s32 1, %s12
    $region7: #{patch_embedding.1} parent=1 // loop_footer_branch
      %11 = sbr.rel target = $region3
    $region8: #{patch_embedding.1} parent=1 // loop_exit
      _
    %794 = vsyncpa [#allocation4], 1
    %s795 = scalar_lea.sflag [#allocation4], 1
    %796 = vsyncpa %s795, 1

</llo_original>
